<compile_context>
chip_gen: v6e
topology: v6e:2x2x1
jax: 0.10.0
libtpu: 0.0.40
codegen_flags: <defaults>
</compile_context>

<pallas_src>
import functools

import jax
import jax.numpy as jnp
from jax import lax
from jax.experimental import pallas as pl
from jax.experimental.pallas import tpu as pltpu


def _round_up(x, m):
    return ((x + m - 1) // m) * m


# ----------------------------------------------------------------------------
# In-kernel LSTM cell math (PyTorch gate order: i, f, g, o)
# ----------------------------------------------------------------------------
def _lstm_cell(gates, c_prev, hidden):
    if hidden < 128:
        # Gate slices are lane-sparse (< 128 lanes): do two full-width EUP
        # passes over the whole (Bp, 4H) tile and slice columns statically.
        # 3 EUP ops per step (sigmoid, tanh, tanh(c)) instead of 5.
        sig = jax.nn.sigmoid(gates)
        tnh = jnp.tanh(gates)
        i_g = sig[:, 0 * hidden:1 * hidden]
        f_g = sig[:, 1 * hidden:2 * hidden]
        g_g = tnh[:, 2 * hidden:3 * hidden]
        o_g = sig[:, 3 * hidden:4 * hidden]
    else:
        # Lane-dense per-gate slices at production H (multiple of 128).
        i_g = jax.nn.sigmoid(gates[:, 0 * hidden:1 * hidden])
        f_g = jax.nn.sigmoid(gates[:, 1 * hidden:2 * hidden])
        g_g = jnp.tanh(gates[:, 2 * hidden:3 * hidden])
        o_g = jax.nn.sigmoid(gates[:, 3 * hidden:4 * hidden])
    c_new = f_g * c_prev + i_g * g_g
    h_new = o_g * jnp.tanh(c_new)
    return h_new, c_new


# ----------------------------------------------------------------------------
# Fused kernel: all LSTM layers + FC head, whole (truncated) sequence per call
# ----------------------------------------------------------------------------
def _fused_lstm_kernel(*refs, n_steps, bp, hidden, n_layers, unroll, use_bf16):
    """Ref layout:
      refs[0]                         x        (n_steps*bp, D)        time-major 2D slab
      refs[1 : 1+3L]                  per layer: w_ih_t (D_in,4H), w_hh_t (H,4H), bias (1,4H)
      refs[1+3L], refs[2+3L]          fc_w_pad (H, Opad), fc_b_pad (1, Opad)
      refs[3+3L]                      out      (n_steps*bp, Opad)     lane-dense output
      refs[4+3L]                      gx       (n_steps*bp, 4H)       VMEM scratch
      refs[5+3L], refs[6+3L]          h slab A / B (n_steps*bp, H)    VMEM scratch
    """
    x_ref = refs[0]
    layer_refs = refs[1:1 + 3 * n_layers]
    fcw_ref = refs[1 + 3 * n_layers]
    fcb_ref = refs[2 + 3 * n_layers]
    out_ref = refs[3 + 3 * n_layers]
    gx_ref = refs[4 + 3 * n_layers]
    h_slabs = (refs[5 + 3 * n_layers], refs[6 + 3 * n_layers])

    mm_dtype = jnp.bfloat16 if use_bf16 else jnp.float32

    def mm(a, b):
        # Matmul on the MXU; f32 accumulation regardless of operand dtype.
        return jnp.dot(a.astype(mm_dtype), b.astype(mm_dtype),
                       preferred_element_type=jnp.float32)

    src = x_ref
    for layer in range(n_layers):
        wih_ref = layer_refs[3 * layer + 0]
        whh_ref = layer_refs[3 * layer + 1]
        b_ref = layer_refs[3 * layer + 2]
        dst = h_slabs[layer % 2]

        # Hoisted input projection: ONE MXU matmul over all time steps.
        gx_ref[...] = mm(src[...], wih_ref[...]) + b_ref[...]

        # Keep the recurrent weight resident (and pre-cast) across the loop.
        whh = whh_ref[...].astype(mm_dtype)

        def step(t, carry, whh=whh, dst=dst):
            h, c = carry
            row = pl.multiple_of(t * bp, 8)          # sublane-aligned offset
            gates = gx_ref[pl.ds(row, bp), :] + jnp.dot(
                h.astype(mm_dtype), whh, preferred_element_type=jnp.float32)
            h, c = _lstm_cell(gates, c, hidden)
            dst[pl.ds(row, bp), :] = h               # store h only; FC is after the loop
            return (h, c)

        h0 = jnp.zeros((bp, hidden), jnp.float32)
        c0 = jnp.zeros((bp, hidden), jnp.float32)
        lax.fori_loop(0, n_steps, step, (h0, c0), unroll=unroll)
        src = dst

    # FC head un-fused from the recurrence: one big lane-dense MXU matmul.
    out_ref[...] = mm(src[...], fcw_ref[...]) + fcb_ref[...]


# ----------------------------------------------------------------------------
# Wrapper
# ----------------------------------------------------------------------------
def _fused_call(x2d, lstm_params, fc_w_pad, fc_b_pad, *, n_steps, bp, hidden,
                use_bf16):
    n_layers = len(lstm_params)
    n_rows = n_steps * bp
    o_pad = fc_w_pad.shape[1]

    # Partial unroll: full for short sequences, 8 otherwise (bounded vregs).
    unroll = n_steps if n_steps <= 8 else 8

    kernel = functools.partial(
        _fused_lstm_kernel, n_steps=n_steps, bp=bp, hidden=hidden,
        n_layers=n_layers, unroll=unroll, use_bf16=use_bf16)

    flat_weights = []
    for (w_ih_t, w_hh_t, bias) in lstm_params:
        flat_weights += [w_ih_t, w_hh_t, bias]

    vmem_spec = pl.BlockSpec(memory_space=pltpu.MemorySpace.VMEM)
    n_in = 1 + len(flat_weights) + 2

    # Explicit VMEM budget from actual slab/weight sizes, with headroom,
    # clamped to 64 MiB so the limit is valid on v7x as well.
    f32 = 4
    d_in0 = x2d.shape[1]
    slab_bytes = n_rows * (d_in0 + o_pad + 4 * hidden + 2 * hidden) * f32
    weight_bytes = (sum(int(w.size) for w in flat_weights)
                    + int(fc_w_pad.size) + int(fc_b_pad.size)) * f32
    vmem_limit = min(max(2 * (slab_bytes + weight_bytes) + (8 << 20), 32 << 20),
                     64 << 20)

    return pl.pallas_call(
        kernel,
        out_shape=jax.ShapeDtypeStruct((n_rows, o_pad), jnp.float32),
        in_specs=[vmem_spec] * n_in,
        out_specs=vmem_spec,
        scratch_shapes=[
            pltpu.VMEM((n_rows, 4 * hidden), jnp.float32),   # gx (hoisted proj)
            pltpu.VMEM((n_rows, hidden), jnp.float32),       # h slab A
            pltpu.VMEM((n_rows, hidden), jnp.float32),       # h slab B
        ],
        compiler_params=pltpu.CompilerParams(vmem_limit_bytes=vmem_limit),
    )(x2d, *flat_weights, fc_w_pad, fc_b_pad)


@functools.partial(jax.jit, static_argnames=("output_window", "use_bf16"))
def lstm_model_forward(x, params, output_window, use_bf16=False):
    """Full LSTMModel.forward.

    x: (B, T, input_dim) batch-first, float32.
    Returns (B, min(output_window, T), output_dim).
    """
    B, T, D = x.shape
    # Exact: out[:, :W] of a stacked LSTM depends only on the first W steps.
    n_steps = min(T, output_window)
    bp = _round_up(B, 8)                                     # sublane multiple

    hidden = params["lstm"][0][1].shape[0]
    O = params["fc_w_t"].shape[1]
    o_pad = _round_up(max(O, 128), 128)                      # lane-dense output

    # Layout plumbing on the (small) original input only.
    x_p = jnp.pad(x, ((0, bp - B), (0, 0), (0, 0)))          # (bp, T, D)
    x_tm = jnp.transpose(x_p, (1, 0, 2))[:n_steps]           # (n_steps, bp, D)
    x2d = x_tm.reshape(n_steps * bp, D)                      # time-major slab

    fc_w_pad = jnp.pad(params["fc_w_t"], ((0, 0), (0, o_pad - O)))
    fc_b_pad = jnp.pad(params["fc_b"], ((0, 0), (0, o_pad - O)))

    y2d = _fused_call(x2d, params["lstm"], fc_w_pad, fc_b_pad,
                      n_steps=n_steps, bp=bp, hidden=hidden,
                      use_bf16=use_bf16)                      # (n_steps*bp, o_pad)

    y = y2d.reshape(n_steps, bp, o_pad)[:, :B, :O]           # drop padding
    return jnp.transpose(y, (1, 0, 2))                       # (B, n_steps, O)


# ----------------------------------------------------------------------------
# Deterministic parameter init (matches nn.LSTM / nn.Linear shapes)
# ----------------------------------------------------------------------------
def init_params(key, input_dim, hidden_dim, layer_dim, output_dim):
    params = {"lstm": []}
    k_lstm = 1.0 / jnp.sqrt(hidden_dim)
    for layer in range(layer_dim):
        d_in = input_dim if layer == 0 else hidden_dim
        key, k1, k2, k3, k4 = jax.random.split(key, 5)
        w_ih = jax.random.uniform(k1, (4 * hidden_dim, d_in), jnp.float32, -k_lstm, k_lstm)
        w_hh = jax.random.uniform(k2, (4 * hidden_dim, hidden_dim), jnp.float32, -k_lstm, k_lstm)
        b_ih = jax.random.uniform(k3, (4 * hidden_dim,), jnp.float32, -k_lstm, k_lstm)
        b_hh = jax.random.uniform(k4, (4 * hidden_dim,), jnp.float32, -k_lstm, k_lstm)
        # pre-transpose weights and fold biases for the kernel
        params["lstm"].append((w_ih.T, w_hh.T, (b_ih + b_hh)[None, :]))

    key, k1, k2 = jax.random.split(key, 3)
    k_fc = 1.0 / jnp.sqrt(hidden_dim)
    fc_w = jax.random.uniform(k1, (output_dim, hidden_dim), jnp.float32, -k_fc, k_fc)
    fc_b = jax.random.uniform(k2, (output_dim,), jnp.float32, -k_fc, k_fc)
    params["fc_w_t"] = fc_w.T
    params["fc_b"] = fc_b[None, :]
    return params


# ----------------------------------------------------------------------------
# Pure-JAX reference (full-length computation, for correctness check)
# ----------------------------------------------------------------------------
def reference_forward(x, params, output_window):
    B, T, _ = x.shape
    h_seq = x
    for (w_ih_t, w_hh_t, bias_2d) in params["lstm"]:
        H = w_hh_t.shape[0]

        def step(carry, x_t):
            h, c = carry
            gates = x_t @ w_ih_t + h @ w_hh_t + bias_2d
            i = jax.nn.sigmoid(gates[:, 0 * H:1 * H])
            f = jax.nn.sigmoid(gates[:, 1 * H:2 * H])
            g = jnp.tanh(gates[:, 2 * H:3 * H])
            o = jax.nn.sigmoid(gates[:, 3 * H:4 * H])
            c = f * c + i * g
            h = o * jnp.tanh(c)
            return (h, c), h

        init = (jnp.zeros((B, H), jnp.float32), jnp.zeros((B, H), jnp.float32))
        _, hs = jax.lax.scan(step, init, jnp.transpose(h_seq, (1, 0, 2)))
        h_seq = jnp.transpose(hs, (1, 0, 2))
    out = h_seq[:, :output_window, :]
    return out @ params["fc_w_t"] + params["fc_b"]


# ----------------------------------------------------------------------------
if __name__ == "__main__":
    # Small shapes consistent with the module's forward.
    B, T = 2, 8
    input_dim, hidden_dim, layer_dim, output_dim = 4, 32, 2, 4
    output_window = 4

    key = jax.random.PRNGKey(0)
    key, kx = jax.random.split(key)
    x = jax.random.normal(kx, (B, T, input_dim), dtype=jnp.float32)

    params = init_params(key, input_dim, hidden_dim, layer_dim, output_dim)
    y_ref = reference_forward(x, params, output_window)

    # f32 MXU path: tight check against the pure-JAX reference.
    y = jax.block_until_ready(lstm_model_forward(x, params, output_window=output_window))
    assert y.shape == (B, output_window, output_dim), y.shape
    assert jnp.allclose(y, y_ref, atol=1e-4, rtol=1e-4), float(jnp.max(jnp.abs(y - y_ref)))

    # bf16 MXU path (v5e/v6e/v7x perf option): bf16 matmul operands, f32
    # accumulation, f32 cell math. Looser tolerance by construction.
    y_bf16 = jax.block_until_ready(
        lstm_model_forward(x, params, output_window=output_window, use_bf16=True))
    assert jnp.allclose(y_bf16, y_ref, atol=1e-1, rtol=1e-1), float(
        jnp.max(jnp.abs(y_bf16 - y_ref)))

    print("KERNEL_OK")
</pallas_src>

<mosaic_0001>
module attributes {stable_mosaic.version = 11 : i64} {
  func.func @_fused_lstm_kernel(%arg0: memref<32x4xf32, #tpu.memory_space<vmem>>, %arg1: memref<4x128xf32, #tpu.memory_space<vmem>>, %arg2: memref<32x128xf32, #tpu.memory_space<vmem>>, %arg3: memref<1x128xf32, #tpu.memory_space<vmem>>, %arg4: memref<32x128xf32, #tpu.memory_space<vmem>>, %arg5: memref<32x128xf32, #tpu.memory_space<vmem>>, %arg6: memref<1x128xf32, #tpu.memory_space<vmem>>, %arg7: memref<32x128xf32, #tpu.memory_space<vmem>>, %arg8: memref<1x128xf32, #tpu.memory_space<vmem>>, %arg9: memref<32x128xf32, #tpu.memory_space<vmem>>, %arg10: memref<32x128xf32, #tpu.memory_space<vmem>>, %arg11: memref<32x32xf32, #tpu.memory_space<vmem>>, %arg12: memref<32x32xf32, #tpu.memory_space<vmem>>) attributes {dimension_semantics = [], scalar_prefetch = 0 : i64, scratch_operands = 3 : i64, tpu.core_type = #tpu.core_type<tc>} {
    %c0 = arith.constant 0 : index
    %c0_0 = arith.constant 0 : index
    %0 = vector.load %arg0[%c0, %c0_0] : memref<32x4xf32, #tpu.memory_space<vmem>>, vector<32x4xf32>
    %c0_1 = arith.constant 0 : index
    %c0_2 = arith.constant 0 : index
    %1 = vector.load %arg1[%c0_1, %c0_2] : memref<4x128xf32, #tpu.memory_space<vmem>>, vector<4x128xf32>
    %cst = arith.constant dense<0.000000e+00> : vector<32x128xf32>
    %2 = tpu.matmul %0, %1, %cst {dimension_numbers = #tpu.dot_dimension_numbers<[1], [0], [0], [1], [0, 0, 1, 1], [], []>} : vector<32x4xf32>, vector<4x128xf32>, vector<32x128xf32> -> vector<32x128xf32>
    %c0_3 = arith.constant 0 : index
    %c0_4 = arith.constant 0 : index
    %3 = vector.load %arg3[%c0_3, %c0_4] : memref<1x128xf32, #tpu.memory_space<vmem>>, vector<1x128xf32>
    %4 = vector.broadcast %3 : vector<1x128xf32> to vector<32x128xf32>
    %5 = arith.addf %2, %4 : vector<32x128xf32>
    %c0_5 = arith.constant 0 : index
    %c0_6 = arith.constant 0 : index
    %6 = vector.load %arg10[%c0_5, %c0_6] : memref<32x128xf32, #tpu.memory_space<vmem>>, vector<32x128xf32>
    tpu.vector_store %arg10[%c0_5, %c0_6], %5 {strides = array<i32>} : memref<32x128xf32, #tpu.memory_space<vmem>>, vector<32x128xf32>,
    %c0_7 = arith.constant 0 : index
    %c0_8 = arith.constant 0 : index
    %7 = vector.load %arg2[%c0_7, %c0_8] : memref<32x128xf32, #tpu.memory_space<vmem>>, vector<32x128xf32>
    %cst_9 = arith.constant 0.000000e+00 : f32
    %8 = vector.broadcast %cst_9 : f32 to vector<8x32xf32>
    %cst_10 = arith.constant 0.000000e+00 : f32
    %9 = vector.broadcast %cst_10 : f32 to vector<8x32xf32>
    %c0_i32 = arith.constant 0 : i32
    %c8_i32 = arith.constant 8 : i32
    %10 = arith.muli %c0_i32, %c8_i32 : i32
    %11 = tpu.assume_multiple %10, 8 : i32
    %12 = arith.index_cast %11 : i32 to index
    %c0_11 = arith.constant 0 : index
    %13 = vector.load %arg10[%12, %c0_11] : memref<32x128xf32, #tpu.memory_space<vmem>>, vector<8x128xf32>
    %cst_12 = arith.constant dense<0.000000e+00> : vector<8x128xf32>
    %14 = tpu.matmul %8, %7, %cst_12 {dimension_numbers = #tpu.dot_dimension_numbers<[1], [0], [0], [1], [0, 0, 1, 1], [], []>} : vector<8x32xf32>, vector<32x128xf32>, vector<8x128xf32> -> vector<8x128xf32>
    %15 = arith.addf %13, %14 : vector<8x128xf32>
    %16 = arith.negf %15 : vector<8x128xf32>
    %17 = math.exp %16 : vector<8x128xf32>
    %cst_13 = arith.constant 1.000000e+00 : f32
    %18 = vector.broadcast %cst_13 : f32 to vector<8x128xf32>
    %19 = arith.addf %18, %17 : vector<8x128xf32>
    %20 = arith.divf %18, %19 : vector<8x128xf32>
    %21 = math.tanh %15 : vector<8x128xf32>
    %22 = vector.extract_strided_slice %20 {offsets = [0, 0], sizes = [8, 32], strides = [1, 1]} : vector<8x128xf32> to vector<8x32xf32>
    %23 = vector.extract_strided_slice %20 {offsets = [0, 32], sizes = [8, 32], strides = [1, 1]} : vector<8x128xf32> to vector<8x32xf32>
    %24 = vector.extract_strided_slice %21 {offsets = [0, 64], sizes = [8, 32], strides = [1, 1]} : vector<8x128xf32> to vector<8x32xf32>
    %25 = vector.extract_strided_slice %20 {offsets = [0, 96], sizes = [8, 32], strides = [1, 1]} : vector<8x128xf32> to vector<8x32xf32>
    %26 = arith.mulf %23, %9 : vector<8x32xf32>
    %27 = arith.mulf %22, %24 : vector<8x32xf32>
    %28 = arith.addf %26, %27 : vector<8x32xf32>
    %29 = math.tanh %28 : vector<8x32xf32>
    %30 = arith.mulf %25, %29 : vector<8x32xf32>
    %31 = arith.index_cast %11 : i32 to index
    %c0_14 = arith.constant 0 : index
    %32 = vector.load %arg11[%31, %c0_14] : memref<32x32xf32, #tpu.memory_space<vmem>>, vector<8x32xf32>
    tpu.vector_store %arg11[%31, %c0_14], %30 {strides = array<i32>} : memref<32x32xf32, #tpu.memory_space<vmem>>, vector<8x32xf32>,
    %c1_i32 = arith.constant 1 : i32
    %c8_i32_15 = arith.constant 8 : i32
    %33 = arith.muli %c1_i32, %c8_i32_15 : i32
    %34 = tpu.assume_multiple %33, 8 : i32
    %35 = arith.index_cast %34 : i32 to index
    %c0_16 = arith.constant 0 : index
    %36 = vector.load %arg10[%35, %c0_16] : memref<32x128xf32, #tpu.memory_space<vmem>>, vector<8x128xf32>
    %cst_17 = arith.constant dense<0.000000e+00> : vector<8x128xf32>
    %37 = tpu.matmul %30, %7, %cst_17 {dimension_numbers = #tpu.dot_dimension_numbers<[1], [0], [0], [1], [0, 0, 1, 1], [], []>} : vector<8x32xf32>, vector<32x128xf32>, vector<8x128xf32> -> vector<8x128xf32>
    %38 = arith.addf %36, %37 : vector<8x128xf32>
    %39 = arith.negf %38 : vector<8x128xf32>
    %40 = math.exp %39 : vector<8x128xf32>
    %cst_18 = arith.constant 1.000000e+00 : f32
    %41 = vector.broadcast %cst_18 : f32 to vector<8x128xf32>
    %42 = arith.addf %41, %40 : vector<8x128xf32>
    %43 = arith.divf %41, %42 : vector<8x128xf32>
    %44 = math.tanh %38 : vector<8x128xf32>
    %45 = vector.extract_strided_slice %43 {offsets = [0, 0], sizes = [8, 32], strides = [1, 1]} : vector<8x128xf32> to vector<8x32xf32>
    %46 = vector.extract_strided_slice %43 {offsets = [0, 32], sizes = [8, 32], strides = [1, 1]} : vector<8x128xf32> to vector<8x32xf32>
    %47 = vector.extract_strided_slice %44 {offsets = [0, 64], sizes = [8, 32], strides = [1, 1]} : vector<8x128xf32> to vector<8x32xf32>
    %48 = vector.extract_strided_slice %43 {offsets = [0, 96], sizes = [8, 32], strides = [1, 1]} : vector<8x128xf32> to vector<8x32xf32>
    %49 = arith.mulf %46, %28 : vector<8x32xf32>
    %50 = arith.mulf %45, %47 : vector<8x32xf32>
    %51 = arith.addf %49, %50 : vector<8x32xf32>
    %52 = math.tanh %51 : vector<8x32xf32>
    %53 = arith.mulf %48, %52 : vector<8x32xf32>
    %54 = arith.index_cast %34 : i32 to index
    %c0_19 = arith.constant 0 : index
    %55 = vector.load %arg11[%54, %c0_19] : memref<32x32xf32, #tpu.memory_space<vmem>>, vector<8x32xf32>
    tpu.vector_store %arg11[%54, %c0_19], %53 {strides = array<i32>} : memref<32x32xf32, #tpu.memory_space<vmem>>, vector<8x32xf32>,
    %c2_i32 = arith.constant 2 : i32
    %c8_i32_20 = arith.constant 8 : i32
    %56 = arith.muli %c2_i32, %c8_i32_20 : i32
    %57 = tpu.assume_multiple %56, 8 : i32
    %58 = arith.index_cast %57 : i32 to index
    %c0_21 = arith.constant 0 : index
    %59 = vector.load %arg10[%58, %c0_21] : memref<32x128xf32, #tpu.memory_space<vmem>>, vector<8x128xf32>
    %cst_22 = arith.constant dense<0.000000e+00> : vector<8x128xf32>
    %60 = tpu.matmul %53, %7, %cst_22 {dimension_numbers = #tpu.dot_dimension_numbers<[1], [0], [0], [1], [0, 0, 1, 1], [], []>} : vector<8x32xf32>, vector<32x128xf32>, vector<8x128xf32> -> vector<8x128xf32>
    %61 = arith.addf %59, %60 : vector<8x128xf32>
    %62 = arith.negf %61 : vector<8x128xf32>
    %63 = math.exp %62 : vector<8x128xf32>
    %cst_23 = arith.constant 1.000000e+00 : f32
    %64 = vector.broadcast %cst_23 : f32 to vector<8x128xf32>
    %65 = arith.addf %64, %63 : vector<8x128xf32>
    %66 = arith.divf %64, %65 : vector<8x128xf32>
    %67 = math.tanh %61 : vector<8x128xf32>
    %68 = vector.extract_strided_slice %66 {offsets = [0, 0], sizes = [8, 32], strides = [1, 1]} : vector<8x128xf32> to vector<8x32xf32>
    %69 = vector.extract_strided_slice %66 {offsets = [0, 32], sizes = [8, 32], strides = [1, 1]} : vector<8x128xf32> to vector<8x32xf32>
    %70 = vector.extract_strided_slice %67 {offsets = [0, 64], sizes = [8, 32], strides = [1, 1]} : vector<8x128xf32> to vector<8x32xf32>
    %71 = vector.extract_strided_slice %66 {offsets = [0, 96], sizes = [8, 32], strides = [1, 1]} : vector<8x128xf32> to vector<8x32xf32>
    %72 = arith.mulf %69, %51 : vector<8x32xf32>
    %73 = arith.mulf %68, %70 : vector<8x32xf32>
    %74 = arith.addf %72, %73 : vector<8x32xf32>
    %75 = math.tanh %74 : vector<8x32xf32>
    %76 = arith.mulf %71, %75 : vector<8x32xf32>
    %77 = arith.index_cast %57 : i32 to index
    %c0_24 = arith.constant 0 : index
    %78 = vector.load %arg11[%77, %c0_24] : memref<32x32xf32, #tpu.memory_space<vmem>>, vector<8x32xf32>
    tpu.vector_store %arg11[%77, %c0_24], %76 {strides = array<i32>} : memref<32x32xf32, #tpu.memory_space<vmem>>, vector<8x32xf32>,
    %c3_i32 = arith.constant 3 : i32
    %c8_i32_25 = arith.constant 8 : i32
    %79 = arith.muli %c3_i32, %c8_i32_25 : i32
    %80 = tpu.assume_multiple %79, 8 : i32
    %81 = arith.index_cast %80 : i32 to index
    %c0_26 = arith.constant 0 : index
    %82 = vector.load %arg10[%81, %c0_26] : memref<32x128xf32, #tpu.memory_space<vmem>>, vector<8x128xf32>
    %cst_27 = arith.constant dense<0.000000e+00> : vector<8x128xf32>
    %83 = tpu.matmul %76, %7, %cst_27 {dimension_numbers = #tpu.dot_dimension_numbers<[1], [0], [0], [1], [0, 0, 1, 1], [], []>} : vector<8x32xf32>, vector<32x128xf32>, vector<8x128xf32> -> vector<8x128xf32>
    %84 = arith.addf %82, %83 : vector<8x128xf32>
    %85 = arith.negf %84 : vector<8x128xf32>
    %86 = math.exp %85 : vector<8x128xf32>
    %cst_28 = arith.constant 1.000000e+00 : f32
    %87 = vector.broadcast %cst_28 : f32 to vector<8x128xf32>
    %88 = arith.addf %87, %86 : vector<8x128xf32>
    %89 = arith.divf %87, %88 : vector<8x128xf32>
    %90 = math.tanh %84 : vector<8x128xf32>
    %91 = vector.extract_strided_slice %89 {offsets = [0, 0], sizes = [8, 32], strides = [1, 1]} : vector<8x128xf32> to vector<8x32xf32>
    %92 = vector.extract_strided_slice %89 {offsets = [0, 32], sizes = [8, 32], strides = [1, 1]} : vector<8x128xf32> to vector<8x32xf32>
    %93 = vector.extract_strided_slice %90 {offsets = [0, 64], sizes = [8, 32], strides = [1, 1]} : vector<8x128xf32> to vector<8x32xf32>
    %94 = vector.extract_strided_slice %89 {offsets = [0, 96], sizes = [8, 32], strides = [1, 1]} : vector<8x128xf32> to vector<8x32xf32>
    %95 = arith.mulf %92, %74 : vector<8x32xf32>
    %96 = arith.mulf %91, %93 : vector<8x32xf32>
    %97 = arith.addf %95, %96 : vector<8x32xf32>
    %98 = math.tanh %97 : vector<8x32xf32>
    %99 = arith.mulf %94, %98 : vector<8x32xf32>
    %100 = arith.index_cast %80 : i32 to index
    %c0_29 = arith.constant 0 : index
    %101 = vector.load %arg11[%100, %c0_29] : memref<32x32xf32, #tpu.memory_space<vmem>>, vector<8x32xf32>
    tpu.vector_store %arg11[%100, %c0_29], %99 {strides = array<i32>} : memref<32x32xf32, #tpu.memory_space<vmem>>, vector<8x32xf32>,
    %c4_i32 = arith.constant 4 : i32
    %c0_30 = arith.constant 0 : index
    %c0_31 = arith.constant 0 : index
    %102 = vector.load %arg11[%c0_30, %c0_31] : memref<32x32xf32, #tpu.memory_space<vmem>>, vector<32x32xf32>
    %c0_32 = arith.constant 0 : index
    %c0_33 = arith.constant 0 : index
    %103 = vector.load %arg4[%c0_32, %c0_33] : memref<32x128xf32, #tpu.memory_space<vmem>>, vector<32x128xf32>
    %cst_34 = arith.constant dense<0.000000e+00> : vector<32x128xf32>
    %104 = tpu.matmul %102, %103, %cst_34 {dimension_numbers = #tpu.dot_dimension_numbers<[1], [0], [0], [1], [0, 0, 1, 1], [], []>} : vector<32x32xf32>, vector<32x128xf32>, vector<32x128xf32> -> vector<32x128xf32>
    %c0_35 = arith.constant 0 : index
    %c0_36 = arith.constant 0 : index
    %105 = vector.load %arg6[%c0_35, %c0_36] : memref<1x128xf32, #tpu.memory_space<vmem>>, vector<1x128xf32>
    %106 = vector.broadcast %105 : vector<1x128xf32> to vector<32x128xf32>
    %107 = arith.addf %104, %106 : vector<32x128xf32>
    %c0_37 = arith.constant 0 : index
    %c0_38 = arith.constant 0 : index
    %108 = vector.load %arg10[%c0_37, %c0_38] : memref<32x128xf32, #tpu.memory_space<vmem>>, vector<32x128xf32>
    tpu.vector_store %arg10[%c0_37, %c0_38], %107 {strides = array<i32>} : memref<32x128xf32, #tpu.memory_space<vmem>>, vector<32x128xf32>,
    %c0_39 = arith.constant 0 : index
    %c0_40 = arith.constant 0 : index
    %109 = vector.load %arg5[%c0_39, %c0_40] : memref<32x128xf32, #tpu.memory_space<vmem>>, vector<32x128xf32>
    %cst_41 = arith.constant 0.000000e+00 : f32
    %110 = vector.broadcast %cst_41 : f32 to vector<8x32xf32>
    %cst_42 = arith.constant 0.000000e+00 : f32
    %111 = vector.broadcast %cst_42 : f32 to vector<8x32xf32>
    %c0_i32_43 = arith.constant 0 : i32
    %c8_i32_44 = arith.constant 8 : i32
    %112 = arith.muli %c0_i32_43, %c8_i32_44 : i32
    %113 = tpu.assume_multiple %112, 8 : i32
    %114 = arith.index_cast %113 : i32 to index
    %c0_45 = arith.constant 0 : index
    %115 = vector.load %arg10[%114, %c0_45] : memref<32x128xf32, #tpu.memory_space<vmem>>, vector<8x128xf32>
    %cst_46 = arith.constant dense<0.000000e+00> : vector<8x128xf32>
    %116 = tpu.matmul %110, %109, %cst_46 {dimension_numbers = #tpu.dot_dimension_numbers<[1], [0], [0], [1], [0, 0, 1, 1], [], []>} : vector<8x32xf32>, vector<32x128xf32>, vector<8x128xf32> -> vector<8x128xf32>
    %117 = arith.addf %115, %116 : vector<8x128xf32>
    %118 = arith.negf %117 : vector<8x128xf32>
    %119 = math.exp %118 : vector<8x128xf32>
    %cst_47 = arith.constant 1.000000e+00 : f32
    %120 = vector.broadcast %cst_47 : f32 to vector<8x128xf32>
    %121 = arith.addf %120, %119 : vector<8x128xf32>
    %122 = arith.divf %120, %121 : vector<8x128xf32>
    %123 = math.tanh %117 : vector<8x128xf32>
    %124 = vector.extract_strided_slice %122 {offsets = [0, 0], sizes = [8, 32], strides = [1, 1]} : vector<8x128xf32> to vector<8x32xf32>
    %125 = vector.extract_strided_slice %122 {offsets = [0, 32], sizes = [8, 32], strides = [1, 1]} : vector<8x128xf32> to vector<8x32xf32>
    %126 = vector.extract_strided_slice %123 {offsets = [0, 64], sizes = [8, 32], strides = [1, 1]} : vector<8x128xf32> to vector<8x32xf32>
    %127 = vector.extract_strided_slice %122 {offsets = [0, 96], sizes = [8, 32], strides = [1, 1]} : vector<8x128xf32> to vector<8x32xf32>
    %128 = arith.mulf %125, %111 : vector<8x32xf32>
    %129 = arith.mulf %124, %126 : vector<8x32xf32>
    %130 = arith.addf %128, %129 : vector<8x32xf32>
    %131 = math.tanh %130 : vector<8x32xf32>
    %132 = arith.mulf %127, %131 : vector<8x32xf32>
    %133 = arith.index_cast %113 : i32 to index
    %c0_48 = arith.constant 0 : index
    %134 = vector.load %arg12[%133, %c0_48] : memref<32x32xf32, #tpu.memory_space<vmem>>, vector<8x32xf32>
    tpu.vector_store %arg12[%133, %c0_48], %132 {strides = array<i32>} : memref<32x32xf32, #tpu.memory_space<vmem>>, vector<8x32xf32>,
    %c1_i32_49 = arith.constant 1 : i32
    %c8_i32_50 = arith.constant 8 : i32
    %135 = arith.muli %c1_i32_49, %c8_i32_50 : i32
    %136 = tpu.assume_multiple %135, 8 : i32
    %137 = arith.index_cast %136 : i32 to index
    %c0_51 = arith.constant 0 : index
    %138 = vector.load %arg10[%137, %c0_51] : memref<32x128xf32, #tpu.memory_space<vmem>>, vector<8x128xf32>
    %cst_52 = arith.constant dense<0.000000e+00> : vector<8x128xf32>
    %139 = tpu.matmul %132, %109, %cst_52 {dimension_numbers = #tpu.dot_dimension_numbers<[1], [0], [0], [1], [0, 0, 1, 1], [], []>} : vector<8x32xf32>, vector<32x128xf32>, vector<8x128xf32> -> vector<8x128xf32>
    %140 = arith.addf %138, %139 : vector<8x128xf32>
    %141 = arith.negf %140 : vector<8x128xf32>
    %142 = math.exp %141 : vector<8x128xf32>
    %cst_53 = arith.constant 1.000000e+00 : f32
    %143 = vector.broadcast %cst_53 : f32 to vector<8x128xf32>
    %144 = arith.addf %143, %142 : vector<8x128xf32>
    %145 = arith.divf %143, %144 : vector<8x128xf32>
    %146 = math.tanh %140 : vector<8x128xf32>
    %147 = vector.extract_strided_slice %145 {offsets = [0, 0], sizes = [8, 32], strides = [1, 1]} : vector<8x128xf32> to vector<8x32xf32>
    %148 = vector.extract_strided_slice %145 {offsets = [0, 32], sizes = [8, 32], strides = [1, 1]} : vector<8x128xf32> to vector<8x32xf32>
    %149 = vector.extract_strided_slice %146 {offsets = [0, 64], sizes = [8, 32], strides = [1, 1]} : vector<8x128xf32> to vector<8x32xf32>
    %150 = vector.extract_strided_slice %145 {offsets = [0, 96], sizes = [8, 32], strides = [1, 1]} : vector<8x128xf32> to vector<8x32xf32>
    %151 = arith.mulf %148, %130 : vector<8x32xf32>
    %152 = arith.mulf %147, %149 : vector<8x32xf32>
    %153 = arith.addf %151, %152 : vector<8x32xf32>
    %154 = math.tanh %153 : vector<8x32xf32>
    %155 = arith.mulf %150, %154 : vector<8x32xf32>
    %156 = arith.index_cast %136 : i32 to index
    %c0_54 = arith.constant 0 : index
    %157 = vector.load %arg12[%156, %c0_54] : memref<32x32xf32, #tpu.memory_space<vmem>>, vector<8x32xf32>
    tpu.vector_store %arg12[%156, %c0_54], %155 {strides = array<i32>} : memref<32x32xf32, #tpu.memory_space<vmem>>, vector<8x32xf32>,
    %c2_i32_55 = arith.constant 2 : i32
    %c8_i32_56 = arith.constant 8 : i32
    %158 = arith.muli %c2_i32_55, %c8_i32_56 : i32
    %159 = tpu.assume_multiple %158, 8 : i32
    %160 = arith.index_cast %159 : i32 to index
    %c0_57 = arith.constant 0 : index
    %161 = vector.load %arg10[%160, %c0_57] : memref<32x128xf32, #tpu.memory_space<vmem>>, vector<8x128xf32>
    %cst_58 = arith.constant dense<0.000000e+00> : vector<8x128xf32>
    %162 = tpu.matmul %155, %109, %cst_58 {dimension_numbers = #tpu.dot_dimension_numbers<[1], [0], [0], [1], [0, 0, 1, 1], [], []>} : vector<8x32xf32>, vector<32x128xf32>, vector<8x128xf32> -> vector<8x128xf32>
    %163 = arith.addf %161, %162 : vector<8x128xf32>
    %164 = arith.negf %163 : vector<8x128xf32>
    %165 = math.exp %164 : vector<8x128xf32>
    %cst_59 = arith.constant 1.000000e+00 : f32
    %166 = vector.broadcast %cst_59 : f32 to vector<8x128xf32>
    %167 = arith.addf %166, %165 : vector<8x128xf32>
    %168 = arith.divf %166, %167 : vector<8x128xf32>
    %169 = math.tanh %163 : vector<8x128xf32>
    %170 = vector.extract_strided_slice %168 {offsets = [0, 0], sizes = [8, 32], strides = [1, 1]} : vector<8x128xf32> to vector<8x32xf32>
    %171 = vector.extract_strided_slice %168 {offsets = [0, 32], sizes = [8, 32], strides = [1, 1]} : vector<8x128xf32> to vector<8x32xf32>
    %172 = vector.extract_strided_slice %169 {offsets = [0, 64], sizes = [8, 32], strides = [1, 1]} : vector<8x128xf32> to vector<8x32xf32>
    %173 = vector.extract_strided_slice %168 {offsets = [0, 96], sizes = [8, 32], strides = [1, 1]} : vector<8x128xf32> to vector<8x32xf32>
    %174 = arith.mulf %171, %153 : vector<8x32xf32>
    %175 = arith.mulf %170, %172 : vector<8x32xf32>
    %176 = arith.addf %174, %175 : vector<8x32xf32>
    %177 = math.tanh %176 : vector<8x32xf32>
    %178 = arith.mulf %173, %177 : vector<8x32xf32>
    %179 = arith.index_cast %159 : i32 to index
    %c0_60 = arith.constant 0 : index
    %180 = vector.load %arg12[%179, %c0_60] : memref<32x32xf32, #tpu.memory_space<vmem>>, vector<8x32xf32>
    tpu.vector_store %arg12[%179, %c0_60], %178 {strides = array<i32>} : memref<32x32xf32, #tpu.memory_space<vmem>>, vector<8x32xf32>,
    %c3_i32_61 = arith.constant 3 : i32
    %c8_i32_62 = arith.constant 8 : i32
    %181 = arith.muli %c3_i32_61, %c8_i32_62 : i32
    %182 = tpu.assume_multiple %181, 8 : i32
    %183 = arith.index_cast %182 : i32 to index
    %c0_63 = arith.constant 0 : index
    %184 = vector.load %arg10[%183, %c0_63] : memref<32x128xf32, #tpu.memory_space<vmem>>, vector<8x128xf32>
    %cst_64 = arith.constant dense<0.000000e+00> : vector<8x128xf32>
    %185 = tpu.matmul %178, %109, %cst_64 {dimension_numbers = #tpu.dot_dimension_numbers<[1], [0], [0], [1], [0, 0, 1, 1], [], []>} : vector<8x32xf32>, vector<32x128xf32>, vector<8x128xf32> -> vector<8x128xf32>
    %186 = arith.addf %184, %185 : vector<8x128xf32>
    %187 = arith.negf %186 : vector<8x128xf32>
    %188 = math.exp %187 : vector<8x128xf32>
    %cst_65 = arith.constant 1.000000e+00 : f32
    %189 = vector.broadcast %cst_65 : f32 to vector<8x128xf32>
    %190 = arith.addf %189, %188 : vector<8x128xf32>
    %191 = arith.divf %189, %190 : vector<8x128xf32>
    %192 = math.tanh %186 : vector<8x128xf32>
    %193 = vector.extract_strided_slice %191 {offsets = [0, 0], sizes = [8, 32], strides = [1, 1]} : vector<8x128xf32> to vector<8x32xf32>
    %194 = vector.extract_strided_slice %191 {offsets = [0, 32], sizes = [8, 32], strides = [1, 1]} : vector<8x128xf32> to vector<8x32xf32>
    %195 = vector.extract_strided_slice %192 {offsets = [0, 64], sizes = [8, 32], strides = [1, 1]} : vector<8x128xf32> to vector<8x32xf32>
    %196 = vector.extract_strided_slice %191 {offsets = [0, 96], sizes = [8, 32], strides = [1, 1]} : vector<8x128xf32> to vector<8x32xf32>
    %197 = arith.mulf %194, %176 : vector<8x32xf32>
    %198 = arith.mulf %193, %195 : vector<8x32xf32>
    %199 = arith.addf %197, %198 : vector<8x32xf32>
    %200 = math.tanh %199 : vector<8x32xf32>
    %201 = arith.mulf %196, %200 : vector<8x32xf32>
    %202 = arith.index_cast %182 : i32 to index
    %c0_66 = arith.constant 0 : index
    %203 = vector.load %arg12[%202, %c0_66] : memref<32x32xf32, #tpu.memory_space<vmem>>, vector<8x32xf32>
    tpu.vector_store %arg12[%202, %c0_66], %201 {strides = array<i32>} : memref<32x32xf32, #tpu.memory_space<vmem>>, vector<8x32xf32>,
    %c4_i32_67 = arith.constant 4 : i32
    %c0_68 = arith.constant 0 : index
    %c0_69 = arith.constant 0 : index
    %204 = vector.load %arg12[%c0_68, %c0_69] : memref<32x32xf32, #tpu.memory_space<vmem>>, vector<32x32xf32>
    %c0_70 = arith.constant 0 : index
    %c0_71 = arith.constant 0 : index
    %205 = vector.load %arg7[%c0_70, %c0_71] : memref<32x128xf32, #tpu.memory_space<vmem>>, vector<32x128xf32>
    %cst_72 = arith.constant dense<0.000000e+00> : vector<32x128xf32>
    %206 = tpu.matmul %204, %205, %cst_72 {dimension_numbers = #tpu.dot_dimension_numbers<[1], [0], [0], [1], [0, 0, 1, 1], [], []>} : vector<32x32xf32>, vector<32x128xf32>, vector<32x128xf32> -> vector<32x128xf32>
    %c0_73 = arith.constant 0 : index
    %c0_74 = arith.constant 0 : index
    %207 = vector.load %arg8[%c0_73, %c0_74] : memref<1x128xf32, #tpu.memory_space<vmem>>, vector<1x128xf32>
    %208 = vector.broadcast %207 : vector<1x128xf32> to vector<32x128xf32>
    %209 = arith.addf %206, %208 : vector<32x128xf32>
    %c0_75 = arith.constant 0 : index
    %c0_76 = arith.constant 0 : index
    %210 = vector.load %arg9[%c0_75, %c0_76] : memref<32x128xf32, #tpu.memory_space<vmem>>, vector<32x128xf32>
    tpu.vector_store %arg9[%c0_75, %c0_76], %209 {strides = array<i32>} : memref<32x128xf32, #tpu.memory_space<vmem>>, vector<32x128xf32>,
    return
  }
}

</mosaic_0001>

<llo_original>
// kernel: lstm_model_forward.1
$region0: #{lstm_model_forward.1}
  #allocation0 [shape = 'u32[]', space=smem, size = 0x4, offset = 0x4, fixed_abs, tag = 'smem constant byte address 0x4 - core index']
  #allocation1 [shape = 'u32[144,128]{1,0:T(1,128)}', space=vmem, size = 0x12000, scoped, tag = 'internal scratch']
  #allocation2 [shape = 'f32[32,128]{1,0:T(8,128)}', space=vmem, size = 0x4000, scoped, tag = 'scratch operand']
  #allocation3 [shape = 'f32[32,32]{1,0:T(8,128)}', space=vmem, size = 0x4000, scoped, tag = 'scratch operand']
  #allocation4 [shape = 'f32[32,32]{1,0:T(8,128)}', space=vmem, size = 0x4000, scoped, tag = 'scratch operand']
  %s0 = inlined_call_operand.vmem [shape: f32[32,4], index: 0, kind: input, shape index: {}]
  %s1 = inlined_call_operand.vmem [shape: f32[4,128], index: 1, kind: input, shape index: {}]
  %s2 = inlined_call_operand.vmem [shape: f32[32,128], index: 2, kind: input, shape index: {}]
  %s3 = inlined_call_operand.vmem [shape: f32[1,128], index: 3, kind: input, shape index: {}]
  %s4 = inlined_call_operand.vmem [shape: f32[32,128], index: 4, kind: input, shape index: {}]
  %s5 = inlined_call_operand.vmem [shape: f32[32,128], index: 5, kind: input, shape index: {}]
  %s6 = inlined_call_operand.vmem [shape: f32[1,128], index: 6, kind: input, shape index: {}]
  %s7 = inlined_call_operand.vmem [shape: f32[32,128], index: 7, kind: input, shape index: {}]
  %s8 = inlined_call_operand.vmem [shape: f32[1,128], index: 8, kind: input, shape index: {}]
  %s9 = inlined_call_operand.vmem [shape: f32[32,128], index: 9, kind: output, shape index: {}]
  %s10 = sld [smem:[#allocation0]]
  $region46: #{lstm_model_forward.1} parent=0
    _
  %s12 = ssub.s32 1, %s10
  %s13 = scalar_select 0, %s12, %s10
  // Predicated region
  $region2: #{lstm_model_forward.1} parent=0 // pred_check
    _
  $region3: #{lstm_model_forward.1} parent=0 // pred_check_branch
    %15 = sbr.rel (0) target = $region5
  $region4: #{lstm_model_forward.1} parent=0 // pred_region
    _
  $region5: #{lstm_model_forward.1} parent=0 // pred_fallthru
    _
  // Predicated region
  $region6: #{lstm_model_forward.1} parent=0 // pred_check
    _
  $region7: #{lstm_model_forward.1} parent=0 // pred_check_branch
    %17 = sbr.rel (0) target = $region9
  $region8: #{lstm_model_forward.1} parent=0 // pred_region
    _
  $region9: #{lstm_model_forward.1} parent=0 // pred_fallthru
    _
  // Predicated region
  $region10: #{lstm_model_forward.1} parent=0 // pred_check
    _
  $region11: #{lstm_model_forward.1} parent=0 // pred_check_branch
    %19 = sbr.rel (0) target = $region13
  $region12: #{lstm_model_forward.1} parent=0 // pred_region
    _
  $region13: #{lstm_model_forward.1} parent=0 // pred_fallthru
    _
  // Predicated region
  $region14: #{lstm_model_forward.1} parent=0 // pred_check
    _
  $region15: #{lstm_model_forward.1} parent=0 // pred_check_branch
    %21 = sbr.rel (0) target = $region17
  $region16: #{lstm_model_forward.1} parent=0 // pred_region
    _
  $region17: #{lstm_model_forward.1} parent=0 // pred_fallthru
    _
  // Predicated region
  $region18: #{lstm_model_forward.1} parent=0 // pred_check
    _
  $region19: #{lstm_model_forward.1} parent=0 // pred_check_branch
    %23 = sbr.rel (0) target = $region21
  $region20: #{lstm_model_forward.1} parent=0 // pred_region
    _
  $region21: #{lstm_model_forward.1} parent=0 // pred_fallthru
    _
  // Predicated region
  $region22: #{lstm_model_forward.1} parent=0 // pred_check
    _
  $region23: #{lstm_model_forward.1} parent=0 // pred_check_branch
    %25 = sbr.rel (0) target = $region25
  $region24: #{lstm_model_forward.1} parent=0 // pred_region
    _
  $region25: #{lstm_model_forward.1} parent=0 // pred_fallthru
    _
  // Predicated region
  $region26: #{lstm_model_forward.1} parent=0 // pred_check
    _
  $region27: #{lstm_model_forward.1} parent=0 // pred_check_branch
    %27 = sbr.rel (0) target = $region29
  $region28: #{lstm_model_forward.1} parent=0 // pred_region
    _
  $region29: #{lstm_model_forward.1} parent=0 // pred_fallthru
    _
  // Predicated region
  $region30: #{lstm_model_forward.1} parent=0 // pred_check
    _
  $region31: #{lstm_model_forward.1} parent=0 // pred_check_branch
    %29 = sbr.rel (0) target = $region33
  $region32: #{lstm_model_forward.1} parent=0 // pred_region
    _
  $region33: #{lstm_model_forward.1} parent=0 // pred_fallthru
    _
  // Predicated region
  $region34: #{lstm_model_forward.1} parent=0 // pred_check
    _
  $region35: #{lstm_model_forward.1} parent=0 // pred_check_branch
    %31 = sbr.rel (0) target = $region37
  $region36: #{lstm_model_forward.1} parent=0 // pred_region
    _
  $region37: #{lstm_model_forward.1} parent=0 // pred_fallthru
    _
  %v32 = vld [vmem:[%s0] sm:$0xff]
  %v33 = vld [vmem:[%s0 + $0x8] sm:$0xff]
  %v34 = vld [vmem:[%s0 + $0x10] sm:$0xff]
  %v35 = vld [vmem:[%s0 + $0x18] sm:$0xff]
  %v36 = vld [vmem:[%s1] sm:$0xf]
  %v37 = vld [vmem:[%s3] sm:$0x1]
  %v39 = vlaneseq
  %v40 = vshrl.u32 %v39, 7
  %v41 = vsub.s32 0, %v40
  %v42 = vrot.slane %v37, %v41
  %vm44 = vcmask 31744
  %v46 = vsel %vm44, %v32, 0
  %v49 = vsel %vm44, %v33, 0
  %v52 = vsel %vm44, %v34, 0
  %v55 = vsel %vm44, %v35, 0
  %vm57 = vcmask 1043456
  %v59 = vsel %vm57, %v36, 0
  %61 = vmatprep.subr.mxu0 0.0
  %62 = vmatpush1.msra.mxu0 0.0
  %63 = vmatprep.subr.mxu0 0.0
  %64 = vmatpush1.msra.mxu0 0.0
  %65 = vmatprep.subr.mxu0 0.0
  %66 = vmatpush1.msra.mxu0 0.0
  %67 = vmatprep.subr.mxu0 0.0
  %68 = vmatpush1.msra.mxu0 0.0
  %69 = vmatprep.subr.mxu0 0.0
  %70 = vmatpush1.msra.mxu0 0.0
  %71 = vmatprep.subr.mxu0 0.0
  %72 = vmatpush1.msra.mxu0 0.0
  %73 = vmatprep.subr.mxu0 0.0
  %74 = vmatpush1.msra.mxu0 0.0
  %75 = vmatprep.subr.mxu0 0.0
  %76 = vmatpush1.msra.mxu0 0.0
  %77 = vmatprep.subr.mxu0 0.0
  %78 = vmatpush1.msra.mxu0 0.0
  %79 = vmatprep.subr.mxu0 0.0
  %80 = vmatpush1.msra.mxu0 0.0
  %81 = vmatprep.subr.mxu0 0.0
  %82 = vmatpush1.msra.mxu0 0.0
  %83 = vmatprep.subr.mxu0 0.0
  %84 = vmatpush1.msra.mxu0 0.0
  %85 = vmatprep.subr.mxu0 0.0
  %86 = vmatpush1.msra.mxu0 0.0
  %87 = vmatprep.subr.mxu0 0.0
  %88 = vmatpush1.msra.mxu0 0.0
  %89 = vmatprep.subr.mxu0 0.0
  %90 = vmatpush1.msra.mxu0 0.0
  %91 = vmatprep.subr.mxu0 0.0
  %92 = vmatpush1.msra.mxu0 %v59
  %93 = vmatprep.subr.mxu0 0.0
  %94 = vmatpush2.msra.mxu0 0.0
  %95 = vmatprep.subr.mxu0 0.0
  %96 = vmatpush2.msra.mxu0 0.0
  %97 = vmatprep.subr.mxu0 0.0
  %98 = vmatpush2.msra.mxu0 0.0
  %99 = vmatprep.subr.mxu0 0.0
  %100 = vmatpush2.msra.mxu0 0.0
  %101 = vmatprep.subr.mxu0 0.0
  %102 = vmatpush2.msra.mxu0 0.0
  %103 = vmatprep.subr.mxu0 0.0
  %104 = vmatpush2.msra.mxu0 0.0
  %105 = vmatprep.subr.mxu0 0.0
  %106 = vmatpush2.msra.mxu0 0.0
  %107 = vmatprep.subr.mxu0 0.0
  %108 = vmatpush2.msra.mxu0 0.0
  %109 = vmatprep.subr.mxu0 0.0
  %110 = vmatpush2.msra.mxu0 0.0
  %111 = vmatprep.subr.mxu0 0.0
  %112 = vmatpush2.msra.mxu0 0.0
  %113 = vmatprep.subr.mxu0 0.0
  %114 = vmatpush2.msra.mxu0 0.0
  %115 = vmatprep.subr.mxu0 0.0
  %116 = vmatpush2.msra.mxu0 0.0
  %117 = vmatprep.subr.mxu0 0.0
  %118 = vmatpush2.msra.mxu0 0.0
  %119 = vmatprep.subr.mxu0 0.0
  %120 = vmatpush2.msra.mxu0 0.0
  %121 = vmatprep.subr.mxu0 0.0
  %122 = vmatpush2.msra.mxu0 0.0
  %123 = vmatprep.subr.mxu0 0.0
  %124 = vmatpush2.msra.mxu0 0.0
  %125 = vmatprep.mubr.f32.mxu0 0.0
  %126 = vmatmul.mubr.f32.gmra.mxu0 %v46
  %v127 = vpop.f32.mrf.mxu0
  %v128 = vadd.f32 %v42, %v127
  %v129 = vpop.f32.mrf.mxu0
  %130 = vmatprep.mubr.f32.mxu0 0.0
  %131 = vmatmul.mubr.f32.gmra.mxu0 %v49
  %v132 = vpop.f32.mrf.mxu0
  %v133 = vadd.f32 %v42, %v132
  %v134 = vpop.f32.mrf.mxu0
  %135 = vmatprep.mubr.f32.mxu0 0.0
  %136 = vmatmul.mubr.f32.gmra.mxu0 %v52
  %v137 = vpop.f32.mrf.mxu0
  %v138 = vadd.f32 %v42, %v137
  %v139 = vpop.f32.mrf.mxu0
  %140 = vmatprep.mubr.f32.mxu0 0.0
  %141 = vmatmul.mubr.f32.gmra.mxu0 %v55
  %v142 = vpop.f32.mrf.mxu0
  %v143 = vadd.f32 %v42, %v142
  %v144 = vpop.f32.mrf.mxu0
  %145 = vdwg.mxu0
  %146 = vst [vmem:[#allocation2] sm:$0xff] %v128
  %147 = vst [vmem:[#allocation2 + $0x8] sm:$0xff] %v133
  %148 = vst [vmem:[#allocation2 + $0x10] sm:$0xff] %v138
  %149 = vst [vmem:[#allocation2 + $0x18] sm:$0xff] %v143
  %v150 = vld [vmem:[%s2] sm:$0xff]
  %v151 = vld [vmem:[%s2 + $0x8] sm:$0xff]
  %v152 = vld [vmem:[%s2 + $0x10] sm:$0xff]
  %v153 = vld [vmem:[%s2 + $0x18] sm:$0xff]
  %v154 = vld [vmem:[#allocation2] sm:$0xff]
  %vm155 = vcmask 261120
  %v157 = vsel %vm155, 0.0, 0
  %159 = vmatprep.subr.mxu0 0.0
  %160 = vmatpush1.msra.mxu0 0.0
  %161 = vmatprep.subr.mxu0 0.0
  %162 = vmatpush1.msra.mxu0 0.0
  %163 = vmatprep.subr.mxu0 0.0
  %164 = vmatpush1.msra.mxu0 0.0
  %165 = vmatprep.subr.mxu0 0.0
  %166 = vmatpush1.msra.mxu0 0.0
  %167 = vmatprep.subr.mxu0 0.0
  %168 = vmatpush1.msra.mxu0 0.0
  %169 = vmatprep.subr.mxu0 0.0
  %170 = vmatpush1.msra.mxu0 0.0
  %171 = vmatprep.subr.mxu0 0.0
  %172 = vmatpush1.msra.mxu0 0.0
  %173 = vmatprep.subr.mxu0 0.0
  %174 = vmatpush1.msra.mxu0 0.0
  %175 = vmatprep.subr.mxu0 0.0
  %176 = vmatpush1.msra.mxu0 0.0
  %177 = vmatprep.subr.mxu0 0.0
  %178 = vmatpush1.msra.mxu0 0.0
  %179 = vmatprep.subr.mxu0 0.0
  %180 = vmatpush1.msra.mxu0 0.0
  %181 = vmatprep.subr.mxu0 0.0
  %182 = vmatpush1.msra.mxu0 0.0
  %183 = vmatprep.subr.mxu0 0.0
  %184 = vmatpush1.msra.mxu0 %v153
  %185 = vmatprep.subr.mxu0 0.0
  %186 = vmatpush1.msra.mxu0 %v152
  %187 = vmatprep.subr.mxu0 0.0
  %188 = vmatpush1.msra.mxu0 %v151
  %189 = vmatprep.subr.mxu0 0.0
  %190 = vmatpush1.msra.mxu0 %v150
  %191 = vmatprep.subr.mxu0 0.0
  %192 = vmatpush2.msra.mxu0 0.0
  %193 = vmatprep.subr.mxu0 0.0
  %194 = vmatpush2.msra.mxu0 0.0
  %195 = vmatprep.subr.mxu0 0.0
  %196 = vmatpush2.msra.mxu0 0.0
  %197 = vmatprep.subr.mxu0 0.0
  %198 = vmatpush2.msra.mxu0 0.0
  %199 = vmatprep.subr.mxu0 0.0
  %200 = vmatpush2.msra.mxu0 0.0
  %201 = vmatprep.subr.mxu0 0.0
  %202 = vmatpush2.msra.mxu0 0.0
  %203 = vmatprep.subr.mxu0 0.0
  %204 = vmatpush2.msra.mxu0 0.0
  %205 = vmatprep.subr.mxu0 0.0
  %206 = vmatpush2.msra.mxu0 0.0
  %207 = vmatprep.subr.mxu0 0.0
  %208 = vmatpush2.msra.mxu0 0.0
  %209 = vmatprep.subr.mxu0 0.0
  %210 = vmatpush2.msra.mxu0 0.0
  %211 = vmatprep.subr.mxu0 0.0
  %212 = vmatpush2.msra.mxu0 0.0
  %213 = vmatprep.subr.mxu0 0.0
  %214 = vmatpush2.msra.mxu0 0.0
  %215 = vmatprep.subr.mxu0 0.0
  %216 = vmatpush2.msra.mxu0 0.0
  %217 = vmatprep.subr.mxu0 0.0
  %218 = vmatpush2.msra.mxu0 0.0
  %219 = vmatprep.subr.mxu0 0.0
  %220 = vmatpush2.msra.mxu0 0.0
  %221 = vmatprep.subr.mxu0 0.0
  %222 = vmatpush2.msra.mxu0 0.0
  %223 = vmatprep.mubr.f32.mxu0 0.0
  %224 = vmatmul.mubr.f32.gmra.mxu0 %v157
  %v225 = vpop.f32.mrf.mxu0
  %v226 = vadd.f32 0.0, %v225
  %v227 = vpop.f32.mrf.mxu0
  %228 = vdwg.mxu0
  %v229 = vadd.f32 %v154, %v226
  %v230 = vxor.u32 %v229, 2147483648
  %v231 = vmul.f32 %v230, 1.442695
  %v232 = vpow.pop %v231
  %v233 = vadd.f32 %v232, 1.0
  %v234 = vrcp.pop %v233
  %v235 = vmul.f32 1.0, %v234
  %v236 = vtanh.pop %v229
  %v237 = vmul.f32 %v235, 0.0
  %239 = vrot.lane.b32.xlu0 %v236, 64
  %v240 = vpop.permute.xlu0 %239
  %v242 = vmul.f32 %v235, %v240
  %244 = vrot.lane.b32.xlu0 %v242, 32
  %v245 = vpop.permute.xlu0 %244
  %v247 = vadd.f32 %v237, %v245
  %v248 = vtanh.pop %v247
  %250 = vrot.lane.b32.xlu0 %v248, 64
  %v251 = vpop.permute.xlu0 %250
  %v253 = vmul.f32 %v235, %v251
  %255 = vrot.lane.b32.xlu0 %v253, 32
  %v256 = vpop.permute.xlu0 %255
  %258 = vst.msk [vmem:[#allocation3] sm:$0xff] %vm155, %v256
  %s259 = scalar_lea.vmem [#allocation2], 8
  %v260 = vld [vmem:[%s259] sm:$0xff]
  %v261 = vsel %vm155, %v256, 0
  %263 = vmatprep.subr.mxu0 0.0
  %264 = vmatpush1.msra.mxu0 0.0
  %265 = vmatprep.subr.mxu0 0.0
  %266 = vmatpush1.msra.mxu0 0.0
  %267 = vmatprep.subr.mxu0 0.0
  %268 = vmatpush1.msra.mxu0 0.0
  %269 = vmatprep.subr.mxu0 0.0
  %270 = vmatpush1.msra.mxu0 0.0
  %271 = vmatprep.subr.mxu0 0.0
  %272 = vmatpush1.msra.mxu0 0.0
  %273 = vmatprep.subr.mxu0 0.0
  %274 = vmatpush1.msra.mxu0 0.0
  %275 = vmatprep.subr.mxu0 0.0
  %276 = vmatpush1.msra.mxu0 0.0
  %277 = vmatprep.subr.mxu0 0.0
  %278 = vmatpush1.msra.mxu0 0.0
  %279 = vmatprep.subr.mxu0 0.0
  %280 = vmatpush1.msra.mxu0 0.0
  %281 = vmatprep.subr.mxu0 0.0
  %282 = vmatpush1.msra.mxu0 0.0
  %283 = vmatprep.subr.mxu0 0.0
  %284 = vmatpush1.msra.mxu0 0.0
  %285 = vmatprep.subr.mxu0 0.0
  %286 = vmatpush1.msra.mxu0 0.0
  %287 = vmatprep.subr.mxu0 0.0
  %288 = vmatpush1.msra.mxu0 %v153
  %289 = vmatprep.subr.mxu0 0.0
  %290 = vmatpush1.msra.mxu0 %v152
  %291 = vmatprep.subr.mxu0 0.0
  %292 = vmatpush1.msra.mxu0 %v151
  %293 = vmatprep.subr.mxu0 0.0
  %294 = vmatpush1.msra.mxu0 %v150
  %295 = vmatprep.subr.mxu0 0.0
  %296 = vmatpush2.msra.mxu0 0.0
  %297 = vmatprep.subr.mxu0 0.0
  %298 = vmatpush2.msra.mxu0 0.0
  %299 = vmatprep.subr.mxu0 0.0
  %300 = vmatpush2.msra.mxu0 0.0
  %301 = vmatprep.subr.mxu0 0.0
  %302 = vmatpush2.msra.mxu0 0.0
  %303 = vmatprep.subr.mxu0 0.0
  %304 = vmatpush2.msra.mxu0 0.0
  %305 = vmatprep.subr.mxu0 0.0
  %306 = vmatpush2.msra.mxu0 0.0
  %307 = vmatprep.subr.mxu0 0.0
  %308 = vmatpush2.msra.mxu0 0.0
  %309 = vmatprep.subr.mxu0 0.0
  %310 = vmatpush2.msra.mxu0 0.0
  %311 = vmatprep.subr.mxu0 0.0
  %312 = vmatpush2.msra.mxu0 0.0
  %313 = vmatprep.subr.mxu0 0.0
  %314 = vmatpush2.msra.mxu0 0.0
  %315 = vmatprep.subr.mxu0 0.0
  %316 = vmatpush2.msra.mxu0 0.0
  %317 = vmatprep.subr.mxu0 0.0
  %318 = vmatpush2.msra.mxu0 0.0
  %319 = vmatprep.subr.mxu0 0.0
  %320 = vmatpush2.msra.mxu0 0.0
  %321 = vmatprep.subr.mxu0 0.0
  %322 = vmatpush2.msra.mxu0 0.0
  %323 = vmatprep.subr.mxu0 0.0
  %324 = vmatpush2.msra.mxu0 0.0
  %325 = vmatprep.subr.mxu0 0.0
  %326 = vmatpush2.msra.mxu0 0.0
  %327 = vmatprep.mubr.f32.mxu0 0.0
  %328 = vmatmul.mubr.f32.gmra.mxu0 %v261
  %v329 = vpop.f32.mrf.mxu0
  %v330 = vadd.f32 0.0, %v329
  %v331 = vpop.f32.mrf.mxu0
  %332 = vdwg.mxu0
  %v333 = vadd.f32 %v260, %v330
  %v334 = vxor.u32 %v333, 2147483648
  %v335 = vmul.f32 %v334, 1.442695
  %v336 = vpow.pop %v335
  %v337 = vadd.f32 %v336, 1.0
  %v338 = vrcp.pop %v337
  %v339 = vmul.f32 1.0, %v338
  %v340 = vtanh.pop %v333
  %v341 = vmul.f32 %v339, %v247
  %343 = vrot.lane.b32.xlu0 %v340, 64
  %v344 = vpop.permute.xlu0 %343
  %v346 = vmul.f32 %v339, %v344
  %348 = vrot.lane.b32.xlu0 %v346, 32
  %v349 = vpop.permute.xlu0 %348
  %v351 = vadd.f32 %v341, %v349
  %v352 = vtanh.pop %v351
  %354 = vrot.lane.b32.xlu0 %v352, 64
  %v355 = vpop.permute.xlu0 %354
  %v357 = vmul.f32 %v339, %v355
  %359 = vrot.lane.b32.xlu0 %v357, 32
  %v360 = vpop.permute.xlu0 %359
  %s362 = scalar_lea.vmem [#allocation3], 8
  %363 = vst.msk [vmem:[%s362] sm:$0xff] %vm155, %v360
  %s364 = scalar_lea.vmem [#allocation2], 16
  %v365 = vld [vmem:[%s364] sm:$0xff]
  %v366 = vsel %vm155, %v360, 0
  %368 = vmatprep.subr.mxu0 0.0
  %369 = vmatpush1.msra.mxu0 0.0
  %370 = vmatprep.subr.mxu0 0.0
  %371 = vmatpush1.msra.mxu0 0.0
  %372 = vmatprep.subr.mxu0 0.0
  %373 = vmatpush1.msra.mxu0 0.0
  %374 = vmatprep.subr.mxu0 0.0
  %375 = vmatpush1.msra.mxu0 0.0
  %376 = vmatprep.subr.mxu0 0.0
  %377 = vmatpush1.msra.mxu0 0.0
  %378 = vmatprep.subr.mxu0 0.0
  %379 = vmatpush1.msra.mxu0 0.0
  %380 = vmatprep.subr.mxu0 0.0
  %381 = vmatpush1.msra.mxu0 0.0
  %382 = vmatprep.subr.mxu0 0.0
  %383 = vmatpush1.msra.mxu0 0.0
  %384 = vmatprep.subr.mxu0 0.0
  %385 = vmatpush1.msra.mxu0 0.0
  %386 = vmatprep.subr.mxu0 0.0
  %387 = vmatpush1.msra.mxu0 0.0
  %388 = vmatprep.subr.mxu0 0.0
  %389 = vmatpush1.msra.mxu0 0.0
  %390 = vmatprep.subr.mxu0 0.0
  %391 = vmatpush1.msra.mxu0 0.0
  %392 = vmatprep.subr.mxu0 0.0
  %393 = vmatpush1.msra.mxu0 %v153
  %394 = vmatprep.subr.mxu0 0.0
  %395 = vmatpush1.msra.mxu0 %v152
  %396 = vmatprep.subr.mxu0 0.0
  %397 = vmatpush1.msra.mxu0 %v151
  %398 = vmatprep.subr.mxu0 0.0
  %399 = vmatpush1.msra.mxu0 %v150
  %400 = vmatprep.subr.mxu0 0.0
  %401 = vmatpush2.msra.mxu0 0.0
  %402 = vmatprep.subr.mxu0 0.0
  %403 = vmatpush2.msra.mxu0 0.0
  %404 = vmatprep.subr.mxu0 0.0
  %405 = vmatpush2.msra.mxu0 0.0
  %406 = vmatprep.subr.mxu0 0.0
  %407 = vmatpush2.msra.mxu0 0.0
  %408 = vmatprep.subr.mxu0 0.0
  %409 = vmatpush2.msra.mxu0 0.0
  %410 = vmatprep.subr.mxu0 0.0
  %411 = vmatpush2.msra.mxu0 0.0
  %412 = vmatprep.subr.mxu0 0.0
  %413 = vmatpush2.msra.mxu0 0.0
  %414 = vmatprep.subr.mxu0 0.0
  %415 = vmatpush2.msra.mxu0 0.0
  %416 = vmatprep.subr.mxu0 0.0
  %417 = vmatpush2.msra.mxu0 0.0
  %418 = vmatprep.subr.mxu0 0.0
  %419 = vmatpush2.msra.mxu0 0.0
  %420 = vmatprep.subr.mxu0 0.0
  %421 = vmatpush2.msra.mxu0 0.0
  %422 = vmatprep.subr.mxu0 0.0
  %423 = vmatpush2.msra.mxu0 0.0
  %424 = vmatprep.subr.mxu0 0.0
  %425 = vmatpush2.msra.mxu0 0.0
  %426 = vmatprep.subr.mxu0 0.0
  %427 = vmatpush2.msra.mxu0 0.0
  %428 = vmatprep.subr.mxu0 0.0
  %429 = vmatpush2.msra.mxu0 0.0
  %430 = vmatprep.subr.mxu0 0.0
  %431 = vmatpush2.msra.mxu0 0.0
  %432 = vmatprep.mubr.f32.mxu0 0.0
  %433 = vmatmul.mubr.f32.gmra.mxu0 %v366
  %v434 = vpop.f32.mrf.mxu0
  %v435 = vadd.f32 0.0, %v434
  %v436 = vpop.f32.mrf.mxu0
  %437 = vdwg.mxu0
  %v438 = vadd.f32 %v365, %v435
  %v439 = vxor.u32 %v438, 2147483648
  %v440 = vmul.f32 %v439, 1.442695
  %v441 = vpow.pop %v440
  %v442 = vadd.f32 %v441, 1.0
  %v443 = vrcp.pop %v442
  %v444 = vmul.f32 1.0, %v443
  %v445 = vtanh.pop %v438
  %v446 = vmul.f32 %v444, %v351
  %448 = vrot.lane.b32.xlu0 %v445, 64
  %v449 = vpop.permute.xlu0 %448
  %v451 = vmul.f32 %v444, %v449
  %453 = vrot.lane.b32.xlu0 %v451, 32
  %v454 = vpop.permute.xlu0 %453
  %v456 = vadd.f32 %v446, %v454
  %v457 = vtanh.pop %v456
  %459 = vrot.lane.b32.xlu0 %v457, 64
  %v460 = vpop.permute.xlu0 %459
  %v462 = vmul.f32 %v444, %v460
  %464 = vrot.lane.b32.xlu0 %v462, 32
  %v465 = vpop.permute.xlu0 %464
  %s467 = scalar_lea.vmem [#allocation3], 16
  %468 = vst.msk [vmem:[%s467] sm:$0xff] %vm155, %v465
  %s469 = scalar_lea.vmem [#allocation2], 24
  %v470 = vld [vmem:[%s469] sm:$0xff]
  %v471 = vsel %vm155, %v465, 0
  %473 = vmatprep.subr.mxu0 0.0
  %474 = vmatpush1.msra.mxu0 0.0
  %475 = vmatprep.subr.mxu0 0.0
  %476 = vmatpush1.msra.mxu0 0.0
  %477 = vmatprep.subr.mxu0 0.0
  %478 = vmatpush1.msra.mxu0 0.0
  %479 = vmatprep.subr.mxu0 0.0
  %480 = vmatpush1.msra.mxu0 0.0
  %481 = vmatprep.subr.mxu0 0.0
  %482 = vmatpush1.msra.mxu0 0.0
  %483 = vmatprep.subr.mxu0 0.0
  %484 = vmatpush1.msra.mxu0 0.0
  %485 = vmatprep.subr.mxu0 0.0
  %486 = vmatpush1.msra.mxu0 0.0
  %487 = vmatprep.subr.mxu0 0.0
  %488 = vmatpush1.msra.mxu0 0.0
  %489 = vmatprep.subr.mxu0 0.0
  %490 = vmatpush1.msra.mxu0 0.0
  %491 = vmatprep.subr.mxu0 0.0
  %492 = vmatpush1.msra.mxu0 0.0
  %493 = vmatprep.subr.mxu0 0.0
  %494 = vmatpush1.msra.mxu0 0.0
  %495 = vmatprep.subr.mxu0 0.0
  %496 = vmatpush1.msra.mxu0 0.0
  %497 = vmatprep.subr.mxu0 0.0
  %498 = vmatpush1.msra.mxu0 %v153
  %499 = vmatprep.subr.mxu0 0.0
  %500 = vmatpush1.msra.mxu0 %v152
  %501 = vmatprep.subr.mxu0 0.0
  %502 = vmatpush1.msra.mxu0 %v151
  %503 = vmatprep.subr.mxu0 0.0
  %504 = vmatpush1.msra.mxu0 %v150
  %505 = vmatprep.subr.mxu0 0.0
  %506 = vmatpush2.msra.mxu0 0.0
  %507 = vmatprep.subr.mxu0 0.0
  %508 = vmatpush2.msra.mxu0 0.0
  %509 = vmatprep.subr.mxu0 0.0
  %510 = vmatpush2.msra.mxu0 0.0
  %511 = vmatprep.subr.mxu0 0.0
  %512 = vmatpush2.msra.mxu0 0.0
  %513 = vmatprep.subr.mxu0 0.0
  %514 = vmatpush2.msra.mxu0 0.0
  %515 = vmatprep.subr.mxu0 0.0
  %516 = vmatpush2.msra.mxu0 0.0
  %517 = vmatprep.subr.mxu0 0.0
  %518 = vmatpush2.msra.mxu0 0.0
  %519 = vmatprep.subr.mxu0 0.0
  %520 = vmatpush2.msra.mxu0 0.0
  %521 = vmatprep.subr.mxu0 0.0
  %522 = vmatpush2.msra.mxu0 0.0
  %523 = vmatprep.subr.mxu0 0.0
  %524 = vmatpush2.msra.mxu0 0.0
  %525 = vmatprep.subr.mxu0 0.0
  %526 = vmatpush2.msra.mxu0 0.0
  %527 = vmatprep.subr.mxu0 0.0
  %528 = vmatpush2.msra.mxu0 0.0
  %529 = vmatprep.subr.mxu0 0.0
  %530 = vmatpush2.msra.mxu0 0.0
  %531 = vmatprep.subr.mxu0 0.0
  %532 = vmatpush2.msra.mxu0 0.0
  %533 = vmatprep.subr.mxu0 0.0
  %534 = vmatpush2.msra.mxu0 0.0
  %535 = vmatprep.subr.mxu0 0.0
  %536 = vmatpush2.msra.mxu0 0.0
  %537 = vmatprep.mubr.f32.mxu0 0.0
  %538 = vmatmul.mubr.f32.gmra.mxu0 %v471
  %v539 = vpop.f32.mrf.mxu0
  %v540 = vadd.f32 0.0, %v539
  %v541 = vpop.f32.mrf.mxu0
  %542 = vdwg.mxu0
  %v543 = vadd.f32 %v470, %v540
  %v544 = vxor.u32 %v543, 2147483648
  %v545 = vmul.f32 %v544, 1.442695
  %v546 = vpow.pop %v545
  %v547 = vadd.f32 %v546, 1.0
  %v548 = vrcp.pop %v547
  %v549 = vmul.f32 1.0, %v548
  %v550 = vtanh.pop %v543
  %v551 = vmul.f32 %v549, %v456
  %553 = vrot.lane.b32.xlu0 %v550, 64
  %v554 = vpop.permute.xlu0 %553
  %v556 = vmul.f32 %v549, %v554
  %558 = vrot.lane.b32.xlu0 %v556, 32
  %v559 = vpop.permute.xlu0 %558
  %v561 = vadd.f32 %v551, %v559
  %v562 = vtanh.pop %v561
  %564 = vrot.lane.b32.xlu0 %v562, 64
  %v565 = vpop.permute.xlu0 %564
  %v567 = vmul.f32 %v549, %v565
  %569 = vrot.lane.b32.xlu0 %v567, 32
  %v570 = vpop.permute.xlu0 %569
  %s572 = scalar_lea.vmem [#allocation3], 24
  %573 = vst.msk [vmem:[%s572] sm:$0xff] %vm155, %v570
  %v574 = vld [vmem:[#allocation3] sm:$0xff]
  %v575 = vld [vmem:[#allocation3 + $0x8] sm:$0xff]
  %v576 = vld [vmem:[#allocation3 + $0x10] sm:$0xff]
  %v577 = vld [vmem:[#allocation3 + $0x18] sm:$0xff]
  %v578 = vld [vmem:[%s4] sm:$0xff]
  %v579 = vld [vmem:[%s4 + $0x8] sm:$0xff]
  %v580 = vld [vmem:[%s4 + $0x10] sm:$0xff]
  %v581 = vld [vmem:[%s4 + $0x18] sm:$0xff]
  %v582 = vld [vmem:[%s6] sm:$0x1]
  %v584 = vlaneseq
  %v585 = vshrl.u32 %v584, 7
  %v586 = vsub.s32 0, %v585
  %v587 = vrot.slane %v582, %v586
  %v590 = vsel %vm155, %v574, 0
  %v593 = vsel %vm155, %v575, 0
  %v596 = vsel %vm155, %v576, 0
  %v599 = vsel %vm155, %v577, 0
  %601 = vmatprep.subr.mxu0 0.0
  %602 = vmatpush1.msra.mxu0 0.0
  %603 = vmatprep.subr.mxu0 0.0
  %604 = vmatpush1.msra.mxu0 0.0
  %605 = vmatprep.subr.mxu0 0.0
  %606 = vmatpush1.msra.mxu0 0.0
  %607 = vmatprep.subr.mxu0 0.0
  %608 = vmatpush1.msra.mxu0 0.0
  %609 = vmatprep.subr.mxu0 0.0
  %610 = vmatpush1.msra.mxu0 0.0
  %611 = vmatprep.subr.mxu0 0.0
  %612 = vmatpush1.msra.mxu0 0.0
  %613 = vmatprep.subr.mxu0 0.0
  %614 = vmatpush1.msra.mxu0 0.0
  %615 = vmatprep.subr.mxu0 0.0
  %616 = vmatpush1.msra.mxu0 0.0
  %617 = vmatprep.subr.mxu0 0.0
  %618 = vmatpush1.msra.mxu0 0.0
  %619 = vmatprep.subr.mxu0 0.0
  %620 = vmatpush1.msra.mxu0 0.0
  %621 = vmatprep.subr.mxu0 0.0
  %622 = vmatpush1.msra.mxu0 0.0
  %623 = vmatprep.subr.mxu0 0.0
  %624 = vmatpush1.msra.mxu0 0.0
  %625 = vmatprep.subr.mxu0 0.0
  %626 = vmatpush1.msra.mxu0 %v581
  %627 = vmatprep.subr.mxu0 0.0
  %628 = vmatpush1.msra.mxu0 %v580
  %629 = vmatprep.subr.mxu0 0.0
  %630 = vmatpush1.msra.mxu0 %v579
  %631 = vmatprep.subr.mxu0 0.0
  %632 = vmatpush1.msra.mxu0 %v578
  %633 = vmatprep.subr.mxu0 0.0
  %634 = vmatpush2.msra.mxu0 0.0
  %635 = vmatprep.subr.mxu0 0.0
  %636 = vmatpush2.msra.mxu0 0.0
  %637 = vmatprep.subr.mxu0 0.0
  %638 = vmatpush2.msra.mxu0 0.0
  %639 = vmatprep.subr.mxu0 0.0
  %640 = vmatpush2.msra.mxu0 0.0
  %641 = vmatprep.subr.mxu0 0.0
  %642 = vmatpush2.msra.mxu0 0.0
  %643 = vmatprep.subr.mxu0 0.0
  %644 = vmatpush2.msra.mxu0 0.0
  %645 = vmatprep.subr.mxu0 0.0
  %646 = vmatpush2.msra.mxu0 0.0
  %647 = vmatprep.subr.mxu0 0.0
  %648 = vmatpush2.msra.mxu0 0.0
  %649 = vmatprep.subr.mxu0 0.0
  %650 = vmatpush2.msra.mxu0 0.0
  %651 = vmatprep.subr.mxu0 0.0
  %652 = vmatpush2.msra.mxu0 0.0
  %653 = vmatprep.subr.mxu0 0.0
  %654 = vmatpush2.msra.mxu0 0.0
  %655 = vmatprep.subr.mxu0 0.0
  %656 = vmatpush2.msra.mxu0 0.0
  %657 = vmatprep.subr.mxu0 0.0
  %658 = vmatpush2.msra.mxu0 0.0
  %659 = vmatprep.subr.mxu0 0.0
  %660 = vmatpush2.msra.mxu0 0.0
  %661 = vmatprep.subr.mxu0 0.0
  %662 = vmatpush2.msra.mxu0 0.0
  %663 = vmatprep.subr.mxu0 0.0
  %664 = vmatpush2.msra.mxu0 0.0
  %665 = vmatprep.mubr.f32.mxu0 0.0
  %666 = vmatmul.mubr.f32.gmra.mxu0 %v590
  %v667 = vpop.f32.mrf.mxu0
  %v668 = vadd.f32 %v587, %v667
  %v669 = vpop.f32.mrf.mxu0
  %670 = vmatprep.mubr.f32.mxu0 0.0
  %671 = vmatmul.mubr.f32.gmra.mxu0 %v593
  %v672 = vpop.f32.mrf.mxu0
  %v673 = vadd.f32 %v587, %v672
  %v674 = vpop.f32.mrf.mxu0
  %675 = vmatprep.mubr.f32.mxu0 0.0
  %676 = vmatmul.mubr.f32.gmra.mxu0 %v596
  %v677 = vpop.f32.mrf.mxu0
  %v678 = vadd.f32 %v587, %v677
  %v679 = vpop.f32.mrf.mxu0
  %680 = vmatprep.mubr.f32.mxu0 0.0
  %681 = vmatmul.mubr.f32.gmra.mxu0 %v599
  %v682 = vpop.f32.mrf.mxu0
  %v683 = vadd.f32 %v587, %v682
  %v684 = vpop.f32.mrf.mxu0
  %685 = vdwg.mxu0
  %686 = vst [vmem:[#allocation2] sm:$0xff] %v668
  %687 = vst [vmem:[#allocation2 + $0x8] sm:$0xff] %v673
  %688 = vst [vmem:[#allocation2 + $0x10] sm:$0xff] %v678
  %689 = vst [vmem:[#allocation2 + $0x18] sm:$0xff] %v683
  %v690 = vld [vmem:[%s5] sm:$0xff]
  %v691 = vld [vmem:[%s5 + $0x8] sm:$0xff]
  %v692 = vld [vmem:[%s5 + $0x10] sm:$0xff]
  %v693 = vld [vmem:[%s5 + $0x18] sm:$0xff]
  %v694 = vld [vmem:[#allocation2] sm:$0xff]
  %695 = vmatprep.subr.mxu0 0.0
  %696 = vmatpush1.msra.mxu0 0.0
  %697 = vmatprep.subr.mxu0 0.0
  %698 = vmatpush1.msra.mxu0 0.0
  %699 = vmatprep.subr.mxu0 0.0
  %700 = vmatpush1.msra.mxu0 0.0
  %701 = vmatprep.subr.mxu0 0.0
  %702 = vmatpush1.msra.mxu0 0.0
  %703 = vmatprep.subr.mxu0 0.0
  %704 = vmatpush1.msra.mxu0 0.0
  %705 = vmatprep.subr.mxu0 0.0
  %706 = vmatpush1.msra.mxu0 0.0
  %707 = vmatprep.subr.mxu0 0.0
  %708 = vmatpush1.msra.mxu0 0.0
  %709 = vmatprep.subr.mxu0 0.0
  %710 = vmatpush1.msra.mxu0 0.0
  %711 = vmatprep.subr.mxu0 0.0
  %712 = vmatpush1.msra.mxu0 0.0
  %713 = vmatprep.subr.mxu0 0.0
  %714 = vmatpush1.msra.mxu0 0.0
  %715 = vmatprep.subr.mxu0 0.0
  %716 = vmatpush1.msra.mxu0 0.0
  %717 = vmatprep.subr.mxu0 0.0
  %718 = vmatpush1.msra.mxu0 0.0
  %719 = vmatprep.subr.mxu0 0.0
  %720 = vmatpush1.msra.mxu0 %v693
  %721 = vmatprep.subr.mxu0 0.0
  %722 = vmatpush1.msra.mxu0 %v692
  %723 = vmatprep.subr.mxu0 0.0
  %724 = vmatpush1.msra.mxu0 %v691
  %725 = vmatprep.subr.mxu0 0.0
  %726 = vmatpush1.msra.mxu0 %v690
  %727 = vmatprep.subr.mxu0 0.0
  %728 = vmatpush2.msra.mxu0 0.0
  %729 = vmatprep.subr.mxu0 0.0
  %730 = vmatpush2.msra.mxu0 0.0
  %731 = vmatprep.subr.mxu0 0.0
  %732 = vmatpush2.msra.mxu0 0.0
  %733 = vmatprep.subr.mxu0 0.0
  %734 = vmatpush2.msra.mxu0 0.0
  %735 = vmatprep.subr.mxu0 0.0
  %736 = vmatpush2.msra.mxu0 0.0
  %737 = vmatprep.subr.mxu0 0.0
  %738 = vmatpush2.msra.mxu0 0.0
  %739 = vmatprep.subr.mxu0 0.0
  %740 = vmatpush2.msra.mxu0 0.0
  %741 = vmatprep.subr.mxu0 0.0
  %742 = vmatpush2.msra.mxu0 0.0
  %743 = vmatprep.subr.mxu0 0.0
  %744 = vmatpush2.msra.mxu0 0.0
  %745 = vmatprep.subr.mxu0 0.0
  %746 = vmatpush2.msra.mxu0 0.0
  %747 = vmatprep.subr.mxu0 0.0
  %748 = vmatpush2.msra.mxu0 0.0
  %749 = vmatprep.subr.mxu0 0.0
  %750 = vmatpush2.msra.mxu0 0.0
  %751 = vmatprep.subr.mxu0 0.0
  %752 = vmatpush2.msra.mxu0 0.0
  %753 = vmatprep.subr.mxu0 0.0
  %754 = vmatpush2.msra.mxu0 0.0
  %755 = vmatprep.subr.mxu0 0.0
  %756 = vmatpush2.msra.mxu0 0.0
  %757 = vmatprep.subr.mxu0 0.0
  %758 = vmatpush2.msra.mxu0 0.0
  %759 = vmatprep.mubr.f32.mxu0 0.0
  %760 = vmatmul.mubr.f32.gmra.mxu0 %v157
  %v761 = vpop.f32.mrf.mxu0
  %v762 = vadd.f32 0.0, %v761
  %v763 = vpop.f32.mrf.mxu0
  %764 = vdwg.mxu0
  %v765 = vadd.f32 %v694, %v762
  %v766 = vxor.u32 %v765, 2147483648
  %v767 = vmul.f32 %v766, 1.442695
  %v768 = vpow.pop %v767
  %v769 = vadd.f32 %v768, 1.0
  %v770 = vrcp.pop %v769
  %v771 = vmul.f32 1.0, %v770
  %v772 = vtanh.pop %v765
  %v773 = vmul.f32 %v771, 0.0
  %775 = vrot.lane.b32.xlu0 %v772, 64
  %v776 = vpop.permute.xlu0 %775
  %v778 = vmul.f32 %v771, %v776
  %780 = vrot.lane.b32.xlu0 %v778, 32
  %v781 = vpop.permute.xlu0 %780
  %v783 = vadd.f32 %v773, %v781
  %v784 = vtanh.pop %v783
  %786 = vrot.lane.b32.xlu0 %v784, 64
  %v787 = vpop.permute.xlu0 %786
  %v789 = vmul.f32 %v771, %v787
  %791 = vrot.lane.b32.xlu0 %v789, 32
  %v792 = vpop.permute.xlu0 %791
  %794 = vst.msk [vmem:[#allocation4] sm:$0xff] %vm155, %v792
  %v795 = vld [vmem:[%s259] sm:$0xff]
  %v796 = vsel %vm155, %v792, 0
  %798 = vmatprep.subr.mxu0 0.0
  %799 = vmatpush1.msra.mxu0 0.0
  %800 = vmatprep.subr.mxu0 0.0
  %801 = vmatpush1.msra.mxu0 0.0
  %802 = vmatprep.subr.mxu0 0.0
  %803 = vmatpush1.msra.mxu0 0.0
  %804 = vmatprep.subr.mxu0 0.0
  %805 = vmatpush1.msra.mxu0 0.0
  %806 = vmatprep.subr.mxu0 0.0
  %807 = vmatpush1.msra.mxu0 0.0
  %808 = vmatprep.subr.mxu0 0.0
  %809 = vmatpush1.msra.mxu0 0.0
  %810 = vmatprep.subr.mxu0 0.0
  %811 = vmatpush1.msra.mxu0 0.0
  %812 = vmatprep.subr.mxu0 0.0
  %813 = vmatpush1.msra.mxu0 0.0
  %814 = vmatprep.subr.mxu0 0.0
  %815 = vmatpush1.msra.mxu0 0.0
  %816 = vmatprep.subr.mxu0 0.0
  %817 = vmatpush1.msra.mxu0 0.0
  %818 = vmatprep.subr.mxu0 0.0
  %819 = vmatpush1.msra.mxu0 0.0
  %820 = vmatprep.subr.mxu0 0.0
  %821 = vmatpush1.msra.mxu0 0.0
  %822 = vmatprep.subr.mxu0 0.0
  %823 = vmatpush1.msra.mxu0 %v693
  %824 = vmatprep.subr.mxu0 0.0
  %825 = vmatpush1.msra.mxu0 %v692
  %826 = vmatprep.subr.mxu0 0.0
  %827 = vmatpush1.msra.mxu0 %v691
  %828 = vmatprep.subr.mxu0 0.0
  %829 = vmatpush1.msra.mxu0 %v690
  %830 = vmatprep.subr.mxu0 0.0
  %831 = vmatpush2.msra.mxu0 0.0
  %832 = vmatprep.subr.mxu0 0.0
  %833 = vmatpush2.msra.mxu0 0.0
  %834 = vmatprep.subr.mxu0 0.0
  %835 = vmatpush2.msra.mxu0 0.0
  %836 = vmatprep.subr.mxu0 0.0
  %837 = vmatpush2.msra.mxu0 0.0
  %838 = vmatprep.subr.mxu0 0.0
  %839 = vmatpush2.msra.mxu0 0.0
  %840 = vmatprep.subr.mxu0 0.0
  %841 = vmatpush2.msra.mxu0 0.0
  %842 = vmatprep.subr.mxu0 0.0
  %843 = vmatpush2.msra.mxu0 0.0
  %844 = vmatprep.subr.mxu0 0.0
  %845 = vmatpush2.msra.mxu0 0.0
  %846 = vmatprep.subr.mxu0 0.0
  %847 = vmatpush2.msra.mxu0 0.0
  %848 = vmatprep.subr.mxu0 0.0
  %849 = vmatpush2.msra.mxu0 0.0
  %850 = vmatprep.subr.mxu0 0.0
  %851 = vmatpush2.msra.mxu0 0.0
  %852 = vmatprep.subr.mxu0 0.0
  %853 = vmatpush2.msra.mxu0 0.0
  %854 = vmatprep.subr.mxu0 0.0
  %855 = vmatpush2.msra.mxu0 0.0
  %856 = vmatprep.subr.mxu0 0.0
  %857 = vmatpush2.msra.mxu0 0.0
  %858 = vmatprep.subr.mxu0 0.0
  %859 = vmatpush2.msra.mxu0 0.0
  %860 = vmatprep.subr.mxu0 0.0
  %861 = vmatpush2.msra.mxu0 0.0
  %862 = vmatprep.mubr.f32.mxu0 0.0
  %863 = vmatmul.mubr.f32.gmra.mxu0 %v796
  %v864 = vpop.f32.mrf.mxu0
  %v865 = vadd.f32 0.0, %v864
  %v866 = vpop.f32.mrf.mxu0
  %867 = vdwg.mxu0
  %v868 = vadd.f32 %v795, %v865
  %v869 = vxor.u32 %v868, 2147483648
  %v870 = vmul.f32 %v869, 1.442695
  %v871 = vpow.pop %v870
  %v872 = vadd.f32 %v871, 1.0
  %v873 = vrcp.pop %v872
  %v874 = vmul.f32 1.0, %v873
  %v875 = vtanh.pop %v868
  %v876 = vmul.f32 %v874, %v783
  %878 = vrot.lane.b32.xlu0 %v875, 64
  %v879 = vpop.permute.xlu0 %878
  %v881 = vmul.f32 %v874, %v879
  %883 = vrot.lane.b32.xlu0 %v881, 32
  %v884 = vpop.permute.xlu0 %883
  %v886 = vadd.f32 %v876, %v884
  %v887 = vtanh.pop %v886
  %889 = vrot.lane.b32.xlu0 %v887, 64
  %v890 = vpop.permute.xlu0 %889
  %v892 = vmul.f32 %v874, %v890
  %894 = vrot.lane.b32.xlu0 %v892, 32
  %v895 = vpop.permute.xlu0 %894
  %s897 = scalar_lea.vmem [#allocation4], 8
  %898 = vst.msk [vmem:[%s897] sm:$0xff] %vm155, %v895
  %v899 = vld [vmem:[%s364] sm:$0xff]
  %v900 = vsel %vm155, %v895, 0
  %902 = vmatprep.subr.mxu0 0.0
  %903 = vmatpush1.msra.mxu0 0.0
  %904 = vmatprep.subr.mxu0 0.0
  %905 = vmatpush1.msra.mxu0 0.0
  %906 = vmatprep.subr.mxu0 0.0
  %907 = vmatpush1.msra.mxu0 0.0
  %908 = vmatprep.subr.mxu0 0.0
  %909 = vmatpush1.msra.mxu0 0.0
  %910 = vmatprep.subr.mxu0 0.0
  %911 = vmatpush1.msra.mxu0 0.0
  %912 = vmatprep.subr.mxu0 0.0
  %913 = vmatpush1.msra.mxu0 0.0
  %914 = vmatprep.subr.mxu0 0.0
  %915 = vmatpush1.msra.mxu0 0.0
  %916 = vmatprep.subr.mxu0 0.0
  %917 = vmatpush1.msra.mxu0 0.0
  %918 = vmatprep.subr.mxu0 0.0
  %919 = vmatpush1.msra.mxu0 0.0
  %920 = vmatprep.subr.mxu0 0.0
  %921 = vmatpush1.msra.mxu0 0.0
  %922 = vmatprep.subr.mxu0 0.0
  %923 = vmatpush1.msra.mxu0 0.0
  %924 = vmatprep.subr.mxu0 0.0
  %925 = vmatpush1.msra.mxu0 0.0
  %926 = vmatprep.subr.mxu0 0.0
  %927 = vmatpush1.msra.mxu0 %v693
  %928 = vmatprep.subr.mxu0 0.0
  %929 = vmatpush1.msra.mxu0 %v692
  %930 = vmatprep.subr.mxu0 0.0
  %931 = vmatpush1.msra.mxu0 %v691
  %932 = vmatprep.subr.mxu0 0.0
  %933 = vmatpush1.msra.mxu0 %v690
  %934 = vmatprep.subr.mxu0 0.0
  %935 = vmatpush2.msra.mxu0 0.0
  %936 = vmatprep.subr.mxu0 0.0
  %937 = vmatpush2.msra.mxu0 0.0
  %938 = vmatprep.subr.mxu0 0.0
  %939 = vmatpush2.msra.mxu0 0.0
  %940 = vmatprep.subr.mxu0 0.0
  %941 = vmatpush2.msra.mxu0 0.0
  %942 = vmatprep.subr.mxu0 0.0
  %943 = vmatpush2.msra.mxu0 0.0
  %944 = vmatprep.subr.mxu0 0.0
  %945 = vmatpush2.msra.mxu0 0.0
  %946 = vmatprep.subr.mxu0 0.0
  %947 = vmatpush2.msra.mxu0 0.0
  %948 = vmatprep.subr.mxu0 0.0
  %949 = vmatpush2.msra.mxu0 0.0
  %950 = vmatprep.subr.mxu0 0.0
  %951 = vmatpush2.msra.mxu0 0.0
  %952 = vmatprep.subr.mxu0 0.0
  %953 = vmatpush2.msra.mxu0 0.0
  %954 = vmatprep.subr.mxu0 0.0
  %955 = vmatpush2.msra.mxu0 0.0
  %956 = vmatprep.subr.mxu0 0.0
  %957 = vmatpush2.msra.mxu0 0.0
  %958 = vmatprep.subr.mxu0 0.0
  %959 = vmatpush2.msra.mxu0 0.0
  %960 = vmatprep.subr.mxu0 0.0
  %961 = vmatpush2.msra.mxu0 0.0
  %962 = vmatprep.subr.mxu0 0.0
  %963 = vmatpush2.msra.mxu0 0.0
  %964 = vmatprep.subr.mxu0 0.0
  %965 = vmatpush2.msra.mxu0 0.0
  %966 = vmatprep.mubr.f32.mxu0 0.0
  %967 = vmatmul.mubr.f32.gmra.mxu0 %v900
  %v968 = vpop.f32.mrf.mxu0
  %v969 = vadd.f32 0.0, %v968
  %v970 = vpop.f32.mrf.mxu0
  %971 = vdwg.mxu0
  %v972 = vadd.f32 %v899, %v969
  %v973 = vxor.u32 %v972, 2147483648
  %v974 = vmul.f32 %v973, 1.442695
  %v975 = vpow.pop %v974
  %v976 = vadd.f32 %v975, 1.0
  %v977 = vrcp.pop %v976
  %v978 = vmul.f32 1.0, %v977
  %v979 = vtanh.pop %v972
  %v980 = vmul.f32 %v978, %v886
  %982 = vrot.lane.b32.xlu0 %v979, 64
  %v983 = vpop.permute.xlu0 %982
  %v985 = vmul.f32 %v978, %v983
  %987 = vrot.lane.b32.xlu0 %v985, 32
  %v988 = vpop.permute.xlu0 %987
  %v990 = vadd.f32 %v980, %v988
  %v991 = vtanh.pop %v990
  %993 = vrot.lane.b32.xlu0 %v991, 64
  %v994 = vpop.permute.xlu0 %993
  %v996 = vmul.f32 %v978, %v994
  %998 = vrot.lane.b32.xlu0 %v996, 32
  %v999 = vpop.permute.xlu0 %998
  %s1001 = scalar_lea.vmem [#allocation4], 16
  %1002 = vst.msk [vmem:[%s1001] sm:$0xff] %vm155, %v999
  %v1003 = vld [vmem:[%s469] sm:$0xff]
  %v1004 = vsel %vm155, %v999, 0
  %1006 = vmatprep.subr.mxu0 0.0
  %1007 = vmatpush1.msra.mxu0 0.0
  %1008 = vmatprep.subr.mxu0 0.0
  %1009 = vmatpush1.msra.mxu0 0.0
  %1010 = vmatprep.subr.mxu0 0.0
  %1011 = vmatpush1.msra.mxu0 0.0
  %1012 = vmatprep.subr.mxu0 0.0
  %1013 = vmatpush1.msra.mxu0 0.0
  %1014 = vmatprep.subr.mxu0 0.0
  %1015 = vmatpush1.msra.mxu0 0.0
  %1016 = vmatprep.subr.mxu0 0.0
  %1017 = vmatpush1.msra.mxu0 0.0
  %1018 = vmatprep.subr.mxu0 0.0
  %1019 = vmatpush1.msra.mxu0 0.0
  %1020 = vmatprep.subr.mxu0 0.0
  %1021 = vmatpush1.msra.mxu0 0.0
  %1022 = vmatprep.subr.mxu0 0.0
  %1023 = vmatpush1.msra.mxu0 0.0
  %1024 = vmatprep.subr.mxu0 0.0
  %1025 = vmatpush1.msra.mxu0 0.0
  %1026 = vmatprep.subr.mxu0 0.0
  %1027 = vmatpush1.msra.mxu0 0.0
  %1028 = vmatprep.subr.mxu0 0.0
  %1029 = vmatpush1.msra.mxu0 0.0
  %1030 = vmatprep.subr.mxu0 0.0
  %1031 = vmatpush1.msra.mxu0 %v693
  %1032 = vmatprep.subr.mxu0 0.0
  %1033 = vmatpush1.msra.mxu0 %v692
  %1034 = vmatprep.subr.mxu0 0.0
  %1035 = vmatpush1.msra.mxu0 %v691
  %1036 = vmatprep.subr.mxu0 0.0
  %1037 = vmatpush1.msra.mxu0 %v690
  %1038 = vmatprep.subr.mxu0 0.0
  %1039 = vmatpush2.msra.mxu0 0.0
  %1040 = vmatprep.subr.mxu0 0.0
  %1041 = vmatpush2.msra.mxu0 0.0
  %1042 = vmatprep.subr.mxu0 0.0
  %1043 = vmatpush2.msra.mxu0 0.0
  %1044 = vmatprep.subr.mxu0 0.0
  %1045 = vmatpush2.msra.mxu0 0.0
  %1046 = vmatprep.subr.mxu0 0.0
  %1047 = vmatpush2.msra.mxu0 0.0
  %1048 = vmatprep.subr.mxu0 0.0
  %1049 = vmatpush2.msra.mxu0 0.0
  %1050 = vmatprep.subr.mxu0 0.0
  %1051 = vmatpush2.msra.mxu0 0.0
  %1052 = vmatprep.subr.mxu0 0.0
  %1053 = vmatpush2.msra.mxu0 0.0
  %1054 = vmatprep.subr.mxu0 0.0
  %1055 = vmatpush2.msra.mxu0 0.0
  %1056 = vmatprep.subr.mxu0 0.0
  %1057 = vmatpush2.msra.mxu0 0.0
  %1058 = vmatprep.subr.mxu0 0.0
  %1059 = vmatpush2.msra.mxu0 0.0
  %1060 = vmatprep.subr.mxu0 0.0
  %1061 = vmatpush2.msra.mxu0 0.0
  %1062 = vmatprep.subr.mxu0 0.0
  %1063 = vmatpush2.msra.mxu0 0.0
  %1064 = vmatprep.subr.mxu0 0.0
  %1065 = vmatpush2.msra.mxu0 0.0
  %1066 = vmatprep.subr.mxu0 0.0
  %1067 = vmatpush2.msra.mxu0 0.0
  %1068 = vmatprep.subr.mxu0 0.0
  %1069 = vmatpush2.msra.mxu0 0.0
  %1070 = vmatprep.mubr.f32.mxu0 0.0
  %1071 = vmatmul.mubr.f32.gmra.mxu0 %v1004
  %v1072 = vpop.f32.mrf.mxu0
  %v1073 = vadd.f32 0.0, %v1072
  %v1074 = vpop.f32.mrf.mxu0
  %1075 = vdwg.mxu0
  %v1076 = vadd.f32 %v1003, %v1073
  %v1077 = vxor.u32 %v1076, 2147483648
  %v1078 = vmul.f32 %v1077, 1.442695
  %v1079 = vpow.pop %v1078
  %v1080 = vadd.f32 %v1079, 1.0
  %v1081 = vrcp.pop %v1080
  %v1082 = vmul.f32 1.0, %v1081
  %v1083 = vtanh.pop %v1076
  %v1084 = vmul.f32 %v1082, %v990
  %1086 = vrot.lane.b32.xlu0 %v1083, 64
  %v1087 = vpop.permute.xlu0 %1086
  %v1089 = vmul.f32 %v1082, %v1087
  %1091 = vrot.lane.b32.xlu0 %v1089, 32
  %v1092 = vpop.permute.xlu0 %1091
  %v1094 = vadd.f32 %v1084, %v1092
  %v1095 = vtanh.pop %v1094
  %1097 = vrot.lane.b32.xlu0 %v1095, 64
  %v1098 = vpop.permute.xlu0 %1097
  %v1100 = vmul.f32 %v1082, %v1098
  %1102 = vrot.lane.b32.xlu0 %v1100, 32
  %v1103 = vpop.permute.xlu0 %1102
  %s1105 = scalar_lea.vmem [#allocation4], 24
  %1106 = vst.msk [vmem:[%s1105] sm:$0xff] %vm155, %v1103
  %v1107 = vld [vmem:[#allocation4] sm:$0xff]
  %v1108 = vld [vmem:[#allocation4 + $0x8] sm:$0xff]
  %v1109 = vld [vmem:[#allocation4 + $0x10] sm:$0xff]
  %v1110 = vld [vmem:[#allocation4 + $0x18] sm:$0xff]
  %v1111 = vld [vmem:[%s7] sm:$0xff]
  %v1112 = vld [vmem:[%s7 + $0x8] sm:$0xff]
  %v1113 = vld [vmem:[%s7 + $0x10] sm:$0xff]
  %v1114 = vld [vmem:[%s7 + $0x18] sm:$0xff]
  %v1115 = vld [vmem:[%s8] sm:$0x1]
  %v1117 = vlaneseq
  %v1118 = vshrl.u32 %v1117, 7
  %v1119 = vsub.s32 0, %v1118
  %v1120 = vrot.slane %v1115, %v1119
  %v1123 = vsel %vm155, %v1107, 0
  %v1126 = vsel %vm155, %v1108, 0
  %v1129 = vsel %vm155, %v1109, 0
  %v1132 = vsel %vm155, %v1110, 0
  %1134 = vmatprep.subr.mxu0 0.0
  %1135 = vmatpush1.msra.mxu0 0.0
  %1136 = vmatprep.subr.mxu0 0.0
  %1137 = vmatpush1.msra.mxu0 0.0
  %1138 = vmatprep.subr.mxu0 0.0
  %1139 = vmatpush1.msra.mxu0 0.0
  %1140 = vmatprep.subr.mxu0 0.0
  %1141 = vmatpush1.msra.mxu0 0.0
  %1142 = vmatprep.subr.mxu0 0.0
  %1143 = vmatpush1.msra.mxu0 0.0
  %1144 = vmatprep.subr.mxu0 0.0
  %1145 = vmatpush1.msra.mxu0 0.0
  %1146 = vmatprep.subr.mxu0 0.0
  %1147 = vmatpush1.msra.mxu0 0.0
  %1148 = vmatprep.subr.mxu0 0.0
  %1149 = vmatpush1.msra.mxu0 0.0
  %1150 = vmatprep.subr.mxu0 0.0
  %1151 = vmatpush1.msra.mxu0 0.0
  %1152 = vmatprep.subr.mxu0 0.0
  %1153 = vmatpush1.msra.mxu0 0.0
  %1154 = vmatprep.subr.mxu0 0.0
  %1155 = vmatpush1.msra.mxu0 0.0
  %1156 = vmatprep.subr.mxu0 0.0
  %1157 = vmatpush1.msra.mxu0 0.0
  %1158 = vmatprep.subr.mxu0 0.0
  %1159 = vmatpush1.msra.mxu0 %v1114
  %1160 = vmatprep.subr.mxu0 0.0
  %1161 = vmatpush1.msra.mxu0 %v1113
  %1162 = vmatprep.subr.mxu0 0.0
  %1163 = vmatpush1.msra.mxu0 %v1112
  %1164 = vmatprep.subr.mxu0 0.0
  %1165 = vmatpush1.msra.mxu0 %v1111
  %1166 = vmatprep.subr.mxu0 0.0
  %1167 = vmatpush2.msra.mxu0 0.0
  %1168 = vmatprep.subr.mxu0 0.0
  %1169 = vmatpush2.msra.mxu0 0.0
  %1170 = vmatprep.subr.mxu0 0.0
  %1171 = vmatpush2.msra.mxu0 0.0
  %1172 = vmatprep.subr.mxu0 0.0
  %1173 = vmatpush2.msra.mxu0 0.0
  %1174 = vmatprep.subr.mxu0 0.0
  %1175 = vmatpush2.msra.mxu0 0.0
  %1176 = vmatprep.subr.mxu0 0.0
  %1177 = vmatpush2.msra.mxu0 0.0
  %1178 = vmatprep.subr.mxu0 0.0
  %1179 = vmatpush2.msra.mxu0 0.0
  %1180 = vmatprep.subr.mxu0 0.0
  %1181 = vmatpush2.msra.mxu0 0.0
  %1182 = vmatprep.subr.mxu0 0.0
  %1183 = vmatpush2.msra.mxu0 0.0
  %1184 = vmatprep.subr.mxu0 0.0
  %1185 = vmatpush2.msra.mxu0 0.0
  %1186 = vmatprep.subr.mxu0 0.0
  %1187 = vmatpush2.msra.mxu0 0.0
  %1188 = vmatprep.subr.mxu0 0.0
  %1189 = vmatpush2.msra.mxu0 0.0
  %1190 = vmatprep.subr.mxu0 0.0
  %1191 = vmatpush2.msra.mxu0 0.0
  %1192 = vmatprep.subr.mxu0 0.0
  %1193 = vmatpush2.msra.mxu0 0.0
  %1194 = vmatprep.subr.mxu0 0.0
  %1195 = vmatpush2.msra.mxu0 0.0
  %1196 = vmatprep.subr.mxu0 0.0
  %1197 = vmatpush2.msra.mxu0 0.0
  %1198 = vmatprep.mubr.f32.mxu0 0.0
  %1199 = vmatmul.mubr.f32.gmra.mxu0 %v1123
  %v1200 = vpop.f32.mrf.mxu0
  %v1201 = vadd.f32 %v1120, %v1200
  %v1202 = vpop.f32.mrf.mxu0
  %1203 = vmatprep.mubr.f32.mxu0 0.0
  %1204 = vmatmul.mubr.f32.gmra.mxu0 %v1126
  %v1205 = vpop.f32.mrf.mxu0
  %v1206 = vadd.f32 %v1120, %v1205
  %v1207 = vpop.f32.mrf.mxu0
  %1208 = vmatprep.mubr.f32.mxu0 0.0
  %1209 = vmatmul.mubr.f32.gmra.mxu0 %v1129
  %v1210 = vpop.f32.mrf.mxu0
  %v1211 = vadd.f32 %v1120, %v1210
  %v1212 = vpop.f32.mrf.mxu0
  %1213 = vmatprep.mubr.f32.mxu0 0.0
  %1214 = vmatmul.mubr.f32.gmra.mxu0 %v1132
  %v1215 = vpop.f32.mrf.mxu0
  %v1216 = vadd.f32 %v1120, %v1215
  %v1217 = vpop.f32.mrf.mxu0
  %1218 = vdwg.mxu0
  %1219 = vst [vmem:[%s9] sm:$0xff] %v1201
  %1220 = vst [vmem:[%s9 + $0x8] sm:$0xff] %v1206
  %1221 = vst [vmem:[%s9 + $0x10] sm:$0xff] %v1211
  %1222 = vst [vmem:[%s9 + $0x18] sm:$0xff] %v1216
  // Predicated region
  $region38: #{lstm_model_forward.1} parent=0 // pred_check
    _
  $region39: #{lstm_model_forward.1} parent=0 // pred_check_branch
    %1224 = sbr.rel (0) target = $region41
  $region40: #{lstm_model_forward.1} parent=0 // pred_region
    _
  $region41: #{lstm_model_forward.1} parent=0 // pred_fallthru
    _
  // Predicated region
  $region42: #{lstm_model_forward.1} parent=0 // pred_check
    _
  $region43: #{lstm_model_forward.1} parent=0 // pred_check_branch
    %1226 = sbr.rel (0) target = $region45
  $region44: #{lstm_model_forward.1} parent=0 // pred_region
    _
  $region45: #{lstm_model_forward.1} parent=0 // pred_fallthru
    _

</llo_original>
